<compile_context>
chip_gen: v5e
topology: v5e:2x2
jax: 0.10.0
libtpu: 0.0.40
codegen_flags: <defaults>
</compile_context>

<pallas_src>
import functools
import math

import jax
import jax.numpy as jnp
from jax.experimental import pallas as pl
from jax.experimental.pallas import tpu as pltpu


def _spec(shape):
    return pl.BlockSpec(shape, lambda *_: (0,) * len(shape))


def _round_up(x, m):
    return ((x + m - 1) // m) * m


# ----------------------------------------------------------------------------
# Fused tiled matmul kernel:  out = act( (A @ B) * scale + shift [+ residual] )
# ----------------------------------------------------------------------------
def _matmul_kernel(*refs, act, has_res):
    if has_res:
        a_ref, b_ref, s_ref, t_ref, r_ref, o_ref, acc_ref = refs
    else:
        a_ref, b_ref, s_ref, t_ref, o_ref, acc_ref = refs
        r_ref = None

    @pl.when(pl.program_id(2) == 0)
    def _():
        acc_ref[...] = jnp.zeros_like(acc_ref)

    acc_ref[...] += jnp.dot(a_ref[...], b_ref[...],
                            preferred_element_type=jnp.float32)

    @pl.when(pl.program_id(2) == pl.num_programs(2) - 1)
    def _():
        out = acc_ref[...] * s_ref[...] + t_ref[...]
        if r_ref is not None:
            out = out + r_ref[...].astype(jnp.float32)
        if act == "relu":
            out = jnp.maximum(out, 0.0)
        elif act == "sigmoid":
            out = jax.nn.sigmoid(out)
        o_ref[...] = out.astype(o_ref.dtype)


def fused_matmul(a, b, scale, shift, act="none", residual=None,
                 out_dtype=jnp.float32):
    M, K = a.shape
    _, N = b.shape

    # Tile sizes: lane-aligned K, big M tiles, full-N blocks when N <= 256.
    tm = 512 if M >= 512 else _round_up(M, 8)
    Mp = _round_up(M, tm)
    Kp = _round_up(K, 128)
    if Kp <= 512:
        tk = Kp
    else:
        tk = 128
        for t in (512, 256, 128):
            if Kp % t == 0:
                tk = t
                break
    tn = N if N <= 256 else 256
    if N % tn != 0:
        tn = N

    a_p = a.astype(jnp.bfloat16)
    if (Mp, Kp) != (M, K):
        a_p = jnp.pad(a_p, ((0, Mp - M), (0, Kp - K)))
    b_p = b.astype(jnp.bfloat16)
    if Kp != K:
        b_p = jnp.pad(b_p, ((0, Kp - K), (0, 0)))
    scale = scale.astype(jnp.float32).reshape(1, N)
    shift = shift.astype(jnp.float32).reshape(1, N)

    in_specs = [
        pl.BlockSpec((tm, tk), lambda i, j, k: (i, k)),
        pl.BlockSpec((tk, tn), lambda i, j, k: (k, j)),
        pl.BlockSpec((1, tn), lambda i, j, k: (0, j)),
        pl.BlockSpec((1, tn), lambda i, j, k: (0, j)),
    ]
    args = [a_p, b_p, scale, shift]
    if residual is not None:
        r = residual
        if Mp != M:
            r = jnp.pad(r, ((0, Mp - M), (0, 0)))
        in_specs.append(pl.BlockSpec((tm, tn), lambda i, j, k: (i, j)))
        args.append(r)

    kern = functools.partial(_matmul_kernel, act=act,
                             has_res=residual is not None)
    out = pl.pallas_call(
        kern,
        out_shape=jax.ShapeDtypeStruct((Mp, N), out_dtype),
        grid=(Mp // tm, N // tn, Kp // tk),
        in_specs=in_specs,
        out_specs=pl.BlockSpec((tm, tn), lambda i, j, k: (i, j)),
        scratch_shapes=[pltpu.VMEM((tm, tn), jnp.float32)],
        compiler_params=pltpu.CompilerParams(
            dimension_semantics=("parallel", "parallel", "arbitrary")),
    )(*args)
    if Mp != M:
        out = out[:M]
    return out


# ----------------------------------------------------------------------------
# Convolution = im2col (wrapper) + fused matmul (BN / act / residual fused)
# ----------------------------------------------------------------------------
def _extract_patches(x, kh, kw, stride, pad):
    if pad > 0:
        x = jnp.pad(x, ((0, 0), (pad, pad), (pad, pad), (0, 0)))
    Bn, Hp, Wp, C = x.shape
    oh = (Hp - kh) // stride + 1
    ow = (Wp - kw) // stride + 1
    cols = []
    for i in range(kh):
        for j in range(kw):
            cols.append(x[:, i:i + stride * oh:stride,
                          j:j + stride * ow:stride, :])
    patches = jnp.stack(cols, axis=3)  # (B, oh, ow, kh*kw, C)
    return patches, oh, ow


def conv_bn_act(x, w, bn, stride, pad, act, residual=None,
                out_dtype=jnp.bfloat16):
    out_c, in_c, kh, kw = w.shape
    Bn = x.shape[0]
    patches, oh, ow = _extract_patches(x.astype(jnp.bfloat16), kh, kw,
                                       stride, pad)
    A = patches.reshape(Bn * oh * ow, kh * kw * in_c)
    Bm = jnp.transpose(w, (2, 3, 1, 0)).reshape(kh * kw * in_c, out_c)
    scale, shift = bn
    res2 = (residual.reshape(Bn * oh * ow, out_c)
            if residual is not None else None)
    out = fused_matmul(A, Bm, scale[None, :], shift[None, :], act,
                       residual=res2, out_dtype=out_dtype)
    return out.reshape(Bn, oh, ow, out_c)


# ----------------------------------------------------------------------------
# 3x3 / stride-2 maxpool: phase-decomposed input, 9-tap max inside one kernel
# (no 9x HBM patch duplication).
# ----------------------------------------------------------------------------
def _maxpool_kernel(x_ref, o_ref, *, B, oh, ow):
    out = None
    for i in range(3):
        for j in range(3):
            p0 = ((i % 2) * 2 + (j % 2)) * B
            di, dj = i // 2, j // 2
            tap = x_ref[p0:p0 + B, di:di + oh, dj:dj + ow, :]
            out = tap if out is None else jnp.maximum(out, tap)
    o_ref[...] = out


def maxpool_3x3_s2(x):
    # x is post-ReLU (>= 0) so zero padding acts like -inf padding here.
    Bn, H, W, C = x.shape
    xp = jnp.pad(x, ((0, 0), (1, 1), (1, 1), (0, 0)))
    Hp, Wp = H + 2, W + 2
    oh = (Hp - 3) // 2 + 1
    ow = (Wp - 3) // 2 + 1
    Hq, Wq = (Hp + 1) // 2, (Wp + 1) // 2
    if (2 * Hq, 2 * Wq) != (Hp, Wp):
        xp = jnp.pad(xp, ((0, 0), (0, 2 * Hq - Hp), (0, 2 * Wq - Wp), (0, 0)))
    xph = xp.reshape(Bn, Hq, 2, Wq, 2, C)
    xph = jnp.transpose(xph, (2, 4, 0, 1, 3, 5)).reshape(4 * Bn, Hq, Wq, C)
    return pl.pallas_call(
        functools.partial(_maxpool_kernel, B=Bn, oh=oh, ow=ow),
        out_shape=jax.ShapeDtypeStruct((Bn, oh, ow, C), x.dtype),
        grid=(1,),
        in_specs=[_spec((4 * Bn, Hq, Wq, C))],
        out_specs=_spec((Bn, oh, ow, C)),
    )(xph)


# ----------------------------------------------------------------------------
# Visual head: global avgpool + fc1 + BN + ReLU + fc2 + sigmoid in one kernel
# ----------------------------------------------------------------------------
def _visual_head_kernel(x_ref, w1_ref, s1_ref, t1_ref, w2_ref, b2_ref, o_ref,
                        *, hw):
    acc = x_ref[:, 0, :].astype(jnp.float32)
    for k in range(1, hw):
        acc = acc + x_ref[:, k, :].astype(jnp.float32)
    feats = acc * (1.0 / float(hw))
    h1 = jnp.dot(feats, w1_ref[...], preferred_element_type=jnp.float32)
    h1 = jnp.maximum(h1 * s1_ref[...] + t1_ref[...], 0.0)
    out = jnp.dot(h1, w2_ref[...], preferred_element_type=jnp.float32)
    o_ref[...] = jax.nn.sigmoid(out + b2_ref[...])


def visual_head(v, x):
    Bn, Hh, Ww, C = x.shape
    xr = x.reshape(Bn, Hh * Ww, C)
    scale1, shift1 = v["fc1_bn"]
    s1 = scale1[None, :]
    t1 = (scale1 * v["fc1_b"] + shift1)[None, :]
    w1, w2 = v["fc1_w"], v["fc2_w"]
    b2 = v["fc2_b"][None, :]
    return pl.pallas_call(
        functools.partial(_visual_head_kernel, hw=Hh * Ww),
        out_shape=jax.ShapeDtypeStruct((Bn, 1), jnp.float32),
        grid=(1,),
        in_specs=[_spec(xr.shape), _spec(w1.shape), _spec(s1.shape),
                  _spec(t1.shape), _spec(w2.shape), _spec(b2.shape)],
        out_specs=_spec((Bn, 1)),
    )(xr, w1, s1, t1, w2, b2)


# ----------------------------------------------------------------------------
# Semantic branch: 3-layer bidirectional LSTM + classifier head, ONE kernel.
# Inter-layer activations live in VMEM scratch; T=8 loop fully unrolled.
# ----------------------------------------------------------------------------
def _semantic_kernel(x_ref, mask_ref, wih_ref, whh_ref, b_ref,
                     w1_ref, s1_ref, t1_ref, w2_ref, b2_ref, o_ref,
                     yf0, yb0, yf1, yb1, *, T, B, H, num_layers):
    ybufs = ((yf0, yb0), (yf1, yb1))
    h_final = [None, None]
    for l in range(num_layers):
        cur = ybufs[l % 2]
        prev = ybufs[(l - 1) % 2]
        for d in range(2):
            idx = l * 2 + d
            wih = wih_ref[idx]          # (2H, 4H)
            whh = whh_ref[idx]          # (H, 4H)
            bb = b_ref[idx]             # (1, 4H)
            reverse = (d == 1)
            h = jnp.zeros((B, H), jnp.float32)
            c = jnp.zeros((B, H), jnp.float32)
            for t in range(T):
                tt = (T - 1 - t) if reverse else t
                if l == 0:
                    xw = jnp.dot(x_ref[tt], wih,
                                 preferred_element_type=jnp.float32)
                else:
                    xw = (jnp.dot(prev[0][tt], wih[0:H, :],
                                  preferred_element_type=jnp.float32)
                          + jnp.dot(prev[1][tt], wih[H:2 * H, :],
                                    preferred_element_type=jnp.float32))
                gates = xw + jnp.dot(h, whh,
                                     preferred_element_type=jnp.float32) + bb
                sig = jax.nn.sigmoid(gates)
                i_g = sig[:, 0:H]
                f_g = sig[:, H:2 * H]
                o_g = sig[:, 3 * H:4 * H]
                g_g = jnp.tanh(gates[:, 2 * H:3 * H])
                m = mask_ref[tt]        # (B, 1)
                c_new = f_g * c + i_g * g_g
                h_new = o_g * jnp.tanh(c_new)
                h = m * h_new + (1.0 - m) * h
                c = m * c_new + (1.0 - m) * c
                if l < num_layers - 1:
                    cur[d][tt] = h
            h_final[d] = h
    # classifier head: concat(h_fwd, h_bwd) @ W1 expressed as two partial dots
    h1 = (jnp.dot(h_final[0], w1_ref[0:H, :],
                  preferred_element_type=jnp.float32)
          + jnp.dot(h_final[1], w1_ref[H:2 * H, :],
                    preferred_element_type=jnp.float32))
    h1 = jnp.maximum(h1 * s1_ref[...] + t1_ref[...], 0.0)
    out = jnp.dot(h1, w2_ref[...], preferred_element_type=jnp.float32)
    o_ref[...] = jax.nn.sigmoid(out + b2_ref[...])


def semantic_forward(s, text_btd, lengths):
    B, T, E = text_btd.shape
    H = 8
    x = jnp.transpose(text_btd, (1, 0, 2)).astype(jnp.float32)  # (T, B, E)
    if E < 2 * H:
        x = jnp.pad(x, ((0, 0), (0, 0), (0, 2 * H - E)))
    mask = (jnp.arange(T)[:, None] < lengths[None, :]).astype(jnp.float32)
    mask = mask[:, :, None]  # (T, B, 1)

    wih_l, whh_l, b_l = [], [], []
    for l in range(3):
        for dirn in ("fwd", "bwd"):
            w_ih, w_hh, b = s["lstm"][l][dirn]
            if w_ih.shape[0] < 2 * H:
                w_ih = jnp.pad(w_ih, ((0, 2 * H - w_ih.shape[0]), (0, 0)))
            wih_l.append(w_ih)
            whh_l.append(w_hh)
            b_l.append(b)
    wih = jnp.stack(wih_l)   # (6, 2H, 4H)
    whh = jnp.stack(whh_l)   # (6, H, 4H)
    bb = jnp.stack(b_l)      # (6, 1, 4H)

    scale1, shift1 = s["fc1_bn"]
    s1 = scale1[None, :]
    t1 = (scale1 * s["fc1_b"] + shift1)[None, :]
    w1, w2 = s["fc1_w"], s["fc2_w"]
    b2 = s["fc2_b"][None, :]

    kern = functools.partial(_semantic_kernel, T=T, B=B, H=H, num_layers=3)
    return pl.pallas_call(
        kern,
        out_shape=jax.ShapeDtypeStruct((B, 1), jnp.float32),
        grid=(1,),
        in_specs=[_spec(x.shape), _spec(mask.shape), _spec(wih.shape),
                  _spec(whh.shape), _spec(bb.shape), _spec(w1.shape),
                  _spec(s1.shape), _spec(t1.shape), _spec(w2.shape),
                  _spec(b2.shape)],
        out_specs=_spec((B, 1)),
        scratch_shapes=[pltpu.VMEM((T, B, H), jnp.float32)] * 4,
    )(x, mask, wih, whh, bb, w1, s1, t1, w2, b2)


# ----------------------------------------------------------------------------
# Fusion MLP: Linear(2,8)+BN+ReLU+Linear(8,1)+sigmoid in one kernel
# ----------------------------------------------------------------------------
def _fusion_kernel(vp_ref, sp_ref, w1_ref, s1_ref, t1_ref, w2_ref, b2_ref,
                   o_ref):
    w1 = w1_ref[...]                              # (2, 8)
    h = vp_ref[...] * w1[0:1, :] + sp_ref[...] * w1[1:2, :]
    h = jnp.maximum(h * s1_ref[...] + t1_ref[...], 0.0)
    out = jnp.dot(h, w2_ref[...], preferred_element_type=jnp.float32)
    o_ref[...] = jax.nn.sigmoid(out + b2_ref[...])


# ----------------------------------------------------------------------------
# Deterministic parameter init (synthetic weights, torch layouts)
# ----------------------------------------------------------------------------
class KeyGen:
    def __init__(self, key):
        self.key = key

    def __call__(self):
        self.key, sub = jax.random.split(self.key)
        return sub


def conv_init(kg, out_c, in_c, k):
    fan = in_c * k * k
    return (jax.random.normal(kg(), (out_c, in_c, k, k)) / math.sqrt(fan)
            ).astype(jnp.float32)


def linear_init(kg, d_in, d_out):
    w = (jax.random.normal(kg(), (d_in, d_out)) / math.sqrt(d_in)
         ).astype(jnp.float32)
    b = (0.05 * jax.random.normal(kg(), (d_out,))).astype(jnp.float32)
    return w, b


def bn_fold(kg, c, eps=1e-5):
    gamma = 1.0 + 0.1 * jax.random.normal(kg(), (c,))
    beta = 0.1 * jax.random.normal(kg(), (c,))
    mean = 0.1 * jax.random.normal(kg(), (c,))
    var = 1.0 + 0.1 * jnp.abs(jax.random.normal(kg(), (c,)))
    scale = gamma / jnp.sqrt(var + eps)
    shift = beta - mean * scale
    return scale.astype(jnp.float32), shift.astype(jnp.float32)


def lstm_init(kg, d, h):
    s_i, s_h = 1.0 / math.sqrt(d), 1.0 / math.sqrt(h)
    w_ih = (jax.random.normal(kg(), (4 * h, d)) * s_i).astype(jnp.float32)
    w_hh = (jax.random.normal(kg(), (4 * h, h)) * s_h).astype(jnp.float32)
    b_ih = (0.1 * jax.random.normal(kg(), (4 * h,))).astype(jnp.float32)
    b_hh = (0.1 * jax.random.normal(kg(), (4 * h,))).astype(jnp.float32)
    return (w_ih.T, w_hh.T, (b_ih + b_hh)[None, :])


def init_params(key):
    kg = KeyGen(key)
    p = {}

    # --- VisualModel: ResNet34 trunk + classifier head ---
    v = {}
    v["conv1_w"] = conv_init(kg, 64, 3, 7)
    v["bn1"] = bn_fold(kg, 64)
    blocks = []
    in_c = 64
    for out_c, n, stride in [(64, 3, 1), (128, 4, 2), (256, 6, 2), (512, 3, 2)]:
        for bidx in range(n):
            s = stride if bidx == 0 else 1
            blk = {
                "stride": s,
                "conv1_w": conv_init(kg, out_c, in_c, 3),
                "bn1": bn_fold(kg, out_c),
                "conv2_w": conv_init(kg, out_c, out_c, 3),
                "bn2": bn_fold(kg, out_c),
            }
            if s != 1 or in_c != out_c:
                blk["down_w"] = conv_init(kg, out_c, in_c, 1)
                blk["down_bn"] = bn_fold(kg, out_c)
            blocks.append(blk)
            in_c = out_c
    v["blocks"] = blocks
    v["fc1_w"], v["fc1_b"] = linear_init(kg, 512, 256)
    v["fc1_bn"] = bn_fold(kg, 256)
    v["fc2_w"], v["fc2_b"] = linear_init(kg, 256, 1)
    p["visual"] = v

    # --- SemanticModel: 3-layer bi-LSTM + classifier head ---
    s = {}
    H = 8
    lstm = []
    for layer in range(3):
        d = 8 if layer == 0 else 2 * H
        lstm.append({"fwd": lstm_init(kg, d, H), "bwd": lstm_init(kg, d, H)})
    s["lstm"] = lstm
    s["fc1_w"], s["fc1_b"] = linear_init(kg, 2 * H, 16)
    s["fc1_bn"] = bn_fold(kg, 16)
    s["fc2_w"], s["fc2_b"] = linear_init(kg, 16, 1)
    p["semantic"] = s

    # --- Fusion layer ---
    f = {}
    f["fc1_w"], f["fc1_b"] = linear_init(kg, 2, 8)
    f["fc1_bn"] = bn_fold(kg, 8)
    f["fc2_w"], f["fc2_b"] = linear_init(kg, 8, 1)
    p["fusion"] = f
    return p


# ----------------------------------------------------------------------------
# Forward passes
# ----------------------------------------------------------------------------
def visual_forward(v, image_nchw):
    x = jnp.transpose(image_nchw, (0, 2, 3, 1)).astype(jnp.bfloat16)  # NHWC
    x = conv_bn_act(x, v["conv1_w"], v["bn1"], stride=2, pad=3, act="relu")
    x = maxpool_3x3_s2(x)
    for blk in v["blocks"]:
        identity = x
        out1 = conv_bn_act(x, blk["conv1_w"], blk["bn1"],
                           stride=blk["stride"], pad=1, act="relu")
        if "down_w" in blk:
            identity = conv_bn_act(x, blk["down_w"], blk["down_bn"],
                                   stride=blk["stride"], pad=0, act="none")
        # residual add + ReLU fused into conv2's matmul epilogue
        x = conv_bn_act(out1, blk["conv2_w"], blk["bn2"], stride=1, pad=1,
                        act="relu", residual=identity)
    return visual_head(v, x)


def combined_forward(params, image, text, lengths):
    vp = visual_forward(params["visual"], image)
    sp = semantic_forward(params["semantic"], text, lengths)
    f = params["fusion"]
    scale1, shift1 = f["fc1_bn"]
    s1 = scale1[None, :]
    t1 = (scale1 * f["fc1_b"] + shift1)[None, :]
    b2 = f["fc2_b"][None, :]
    B = vp.shape[0]
    fp = pl.pallas_call(
        _fusion_kernel,
        out_shape=jax.ShapeDtypeStruct((B, 1), jnp.float32),
        grid=(1,),
        in_specs=[_spec((B, 1)), _spec((B, 1)), _spec(f["fc1_w"].shape),
                  _spec(s1.shape), _spec(t1.shape), _spec(f["fc2_w"].shape),
                  _spec(b2.shape)],
        out_specs=_spec((B, 1)),
    )(vp, sp, f["fc1_w"], s1, t1, f["fc2_w"], b2)
    return {"visual_pred": vp, "semantic_pred": sp, "final_pred": fp}


# ----------------------------------------------------------------------------
if __name__ == "__main__":
    key = jax.random.PRNGKey(0)
    kparams, kimg, ktxt = jax.random.split(key, 3)
    params = init_params(kparams)

    image = jax.random.normal(kimg, (2, 3, 64, 64), jnp.float32)   # NCHW
    text = jax.random.normal(ktxt, (2, 8, 8), jnp.float32)         # (B, T, emb)
    text_lengths = jnp.array([8, 5], dtype=jnp.int32)

    out = combined_forward(params, image, text, text_lengths)
    jax.block_until_ready(out)
    assert out["visual_pred"].shape == (2, 1)
    assert out["semantic_pred"].shape == (2, 1)
    assert out["final_pred"].shape == (2, 1)
    print("KERNEL_OK")
</pallas_src>

<mosaic_0001>
module attributes {stable_mosaic.version = 11 : i64} {
  func.func @_matmul_kernel(%arg0: i32, %arg1: i32, %arg2: i32, %arg3: memref<512x256xbf16, #tpu.memory_space<vmem>>, %arg4: memref<256x64xbf16, #tpu.memory_space<vmem>>, %arg5: memref<1x64xf32, #tpu.memory_space<vmem>>, %arg6: memref<1x64xf32, #tpu.memory_space<vmem>>, %arg7: memref<512x64xbf16, #tpu.memory_space<vmem>>, %arg8: memref<512x64xf32, #tpu.memory_space<vmem>>) attributes {dimension_semantics = [#tpu.dimension_semantics<parallel>, #tpu.dimension_semantics<parallel>, #tpu.dimension_semantics<arbitrary>], iteration_bounds = array<i64: 4, 1, 1>, scalar_prefetch = 0 : i64, scratch_operands = 1 : i64, tpu.core_type = #tpu.core_type<tc>, window_params = [{transform_indices = @transform_0, window_bounds = array<i64: 512, 256>}, {transform_indices = @transform_1, window_bounds = array<i64: 256, 64>}, {transform_indices = @transform_2, window_bounds = array<i64: 1, 64>}, {transform_indices = @transform_3, window_bounds = array<i64: 1, 64>}, {transform_indices = @transform_4, window_bounds = array<i64: 512, 64>}]} {
    %c0_i32 = arith.constant 0 : i32
    %0 = arith.cmpi eq, %arg2, %c0_i32 : i32
    %1 = arith.extui %0 : i1 to i32
    %c0_i32_0 = arith.constant 0 : i32
    %2 = arith.cmpi ne, %1, %c0_i32_0 : i32
    scf.if %2 {
      %cst_10 = arith.constant 0.000000e+00 : f32
      %12 = vector.broadcast %cst_10 : f32 to vector<512x64xf32>
      %c0_11 = arith.constant 0 : index
      %c0_12 = arith.constant 0 : index
      %13 = vector.load %arg8[%c0_11, %c0_12] : memref<512x64xf32, #tpu.memory_space<vmem>>, vector<512x64xf32>
      tpu.vector_store %arg8[%c0_11, %c0_12], %12 {strides = array<i32>} : memref<512x64xf32, #tpu.memory_space<vmem>>, vector<512x64xf32>,
    } else {
    }
    %c0 = arith.constant 0 : index
    %c0_1 = arith.constant 0 : index
    %3 = vector.load %arg8[%c0, %c0_1] : memref<512x64xf32, #tpu.memory_space<vmem>>, vector<512x64xf32>
    %c0_2 = arith.constant 0 : index
    %c0_3 = arith.constant 0 : index
    %4 = vector.load %arg3[%c0_2, %c0_3] : memref<512x256xbf16, #tpu.memory_space<vmem>>, vector<512x256xbf16>
    %c0_4 = arith.constant 0 : index
    %c0_5 = arith.constant 0 : index
    %5 = vector.load %arg4[%c0_4, %c0_5] : memref<256x64xbf16, #tpu.memory_space<vmem>>, vector<256x64xbf16>
    %cst = arith.constant dense<0.000000e+00> : vector<512x64xf32>
    %6 = tpu.matmul %4, %5, %cst {dimension_numbers = #tpu.dot_dimension_numbers<[1], [0], [0], [1], [0, 0, 1, 1], [], []>} : vector<512x256xbf16>, vector<256x64xbf16>, vector<512x64xf32> -> vector<512x64xf32>
    %7 = arith.addf %3, %6 : vector<512x64xf32>
    %c0_6 = arith.constant 0 : index
    %c0_7 = arith.constant 0 : index
    %8 = vector.load %arg8[%c0_6, %c0_7] : memref<512x64xf32, #tpu.memory_space<vmem>>, vector<512x64xf32>
    tpu.vector_store %arg8[%c0_6, %c0_7], %7 {strides = array<i32>} : memref<512x64xf32, #tpu.memory_space<vmem>>, vector<512x64xf32>,
    %c0_i32_8 = arith.constant 0 : i32
    %9 = arith.cmpi eq, %arg2, %c0_i32_8 : i32
    %10 = arith.extui %9 : i1 to i32
    %c0_i32_9 = arith.constant 0 : i32
    %11 = arith.cmpi ne, %10, %c0_i32_9 : i32
    scf.if %11 {
      %c0_10 = arith.constant 0 : index
      %c0_11 = arith.constant 0 : index
      %12 = vector.load %arg8[%c0_10, %c0_11] : memref<512x64xf32, #tpu.memory_space<vmem>>, vector<512x64xf32>
      %c0_12 = arith.constant 0 : index
      %c0_13 = arith.constant 0 : index
      %13 = vector.load %arg5[%c0_12, %c0_13] : memref<1x64xf32, #tpu.memory_space<vmem>>, vector<1x64xf32>
      %14 = vector.broadcast %13 : vector<1x64xf32> to vector<512x64xf32>
      %15 = arith.mulf %12, %14 : vector<512x64xf32>
      %c0_14 = arith.constant 0 : index
      %c0_15 = arith.constant 0 : index
      %16 = vector.load %arg6[%c0_14, %c0_15] : memref<1x64xf32, #tpu.memory_space<vmem>>, vector<1x64xf32>
      %17 = vector.broadcast %16 : vector<1x64xf32> to vector<512x64xf32>
      %18 = arith.addf %15, %17 : vector<512x64xf32>
      %cst_16 = arith.constant 0.000000e+00 : f32
      %19 = vector.broadcast %cst_16 : f32 to vector<512x64xf32>
      %20 = arith.maximumf %18, %19 : vector<512x64xf32>
      %21 = arith.truncf %20 : vector<512x64xf32> to vector<512x64xbf16>
      %c0_17 = arith.constant 0 : index
      %c0_18 = arith.constant 0 : index
      %22 = vector.load %arg7[%c0_17, %c0_18] : memref<512x64xbf16, #tpu.memory_space<vmem>>, vector<512x64xbf16>
      tpu.vector_store %arg7[%c0_17, %c0_18], %21 {strides = array<i32>} : memref<512x64xbf16, #tpu.memory_space<vmem>>, vector<512x64xbf16>,
    } else {
    }
    return
  }
  func.func @transform_0(%arg0: i32, %arg1: i32, %arg2: i32) -> (i32, i32) {
    %c0_i32 = arith.constant 0 : i32
    return %arg0, %arg2 : i32, i32
  }
  func.func @transform_1(%arg0: i32, %arg1: i32, %arg2: i32) -> (i32, i32) {
    %c0_i32 = arith.constant 0 : i32
    return %arg2, %arg1 : i32, i32
  }
  func.func @transform_2(%arg0: i32, %arg1: i32, %arg2: i32) -> (i32, i32) {
    %c0_i32 = arith.constant 0 : i32
    %c0_i32_0 = arith.constant 0 : i32
    return %c0_i32, %arg1 : i32, i32
  }
  func.func @transform_3(%arg0: i32, %arg1: i32, %arg2: i32) -> (i32, i32) {
    %c0_i32 = arith.constant 0 : i32
    %c0_i32_0 = arith.constant 0 : i32
    return %c0_i32, %arg1 : i32, i32
  }
  func.func @transform_4(%arg0: i32, %arg1: i32, %arg2: i32) -> (i32, i32) {
    %c0_i32 = arith.constant 0 : i32
    return %arg0, %arg1 : i32, i32
  }
}

</mosaic_0001>

<llo_original>
// kernel: tpu_custom_call.1
$region0: #{tpu_custom_call.1}
  #allocation0 [shape = 'u32[]', space=smem, size = 0x4, offset = 0x4, fixed_abs, tag = 'smem constant byte address 0x4 - core index']
  #allocation1 [shape = 'u32[72,128]{1,0:T(1,128)}', space=vmem, size = 0x9000, scoped, tag = 'internal scratch']
  #allocation2 [shape = 'f32[512,64]{1,0:T(8,128)}', space=vmem, size = 0x40000, scoped, tag = 'scratch operand']
  %s0 = inlined_call_operand.hbm [shape: bf16[2048,256], index: 0, kind: input, shape index: {}]
  %s1 = inlined_call_operand.vmem [shape: bf16[256,64], index: 1, kind: input, shape index: {}]
  %s2 = inlined_call_operand.vmem [shape: f32[1,64], index: 2, kind: input, shape index: {}]
  %s3 = inlined_call_operand.vmem [shape: f32[1,64], index: 3, kind: input, shape index: {}]
  %s4 = inlined_call_operand.vmem [shape: bf16[2048,64], index: 4, kind: output, shape index: {}]
  %s5 = sld [smem:[#allocation0]]
  $region61: #{tpu_custom_call.1} parent=0
    _
  %s7 = ssub.s32 1, %s5
  %s8 = scalar_select 0, %s7, %s5
  $region1: #{tpu_custom_call.1} parent=0
    #allocation3 [shape = 'u8[524288]{0}', space=vmem, size = 0x80000, scoped, tag = 'input window, operand 0']
    #allocation4 [shape = 's32[2]{0}', space=sflag, size = 0x8, scoped, tag = 'scoped memory for tpu_custom_call.1']
    %9 = vsyncpa [#allocation4], 0
    %s10 = scalar_lea.sflag [#allocation4], 1
    %11 = vsyncpa %s10, 0
    loop: start=0, step=1, limit=6
    $region2: #{tpu_custom_call.1} parent=1 // loop_pre_header
      _
    $region3: #{tpu_custom_call.1} parent=1 // loop_header
      %s13 = sphi 0, %s17
      %p14 = scmp.ge.s32.totalorder %s13, 6
      %s20 = sphi 0, %s39
      %s21 = sphi 0, %s35
      %s22 = sphi 0, %s31
      %s23 = sphi 0, %s20
      %s24 = sphi 0, %s21
      %s25 = sphi 0, %s22
      %s26 = sphi 0, %s23
      %s27 = sphi 0, %s24
      %s28 = sphi 0, %s25
      %s44 = sphi 0, %s46
      %s47 = sphi 0, %s44
      %s48 = sphi 0, %s47
      %s64 = sphi 0, %s48
      %s72 = sphi 0, %s74
      %s75 = sphi 0, %s72
      %s76 = sphi 0, %s75
      %s92 = sphi 0, %s76
      %s98 = sphi 0, %s100
      %s101 = sphi 0, %s98
      %s102 = sphi 0, %s101
      %s118 = sphi 0, %s102
      %s124 = sphi 0, %s126
      %s127 = sphi 0, %s124
      %s128 = sphi 0, %s127
      %s144 = sphi 0, %s128
      %s152 = sphi 0, %s154
      %s155 = sphi 0, %s152
      %s156 = sphi 0, %s155
      %s172 = sphi 0, %s156
    $region4: #{tpu_custom_call.1} parent=1 // loop_header_branch
      %16 = sbr.rel (%p14) target = $region8
    $region5: #{tpu_custom_call.1} parent=1 // loop_body
      %s18 = ssub.s32 %s13, 1
      %s19 = ssub.s32 %s13, 2
      %s29 = sadd.s32 1, %s22
      %p30 = scmp.ge.s32.totalorder %s29, 1
      %s31 = scalar_select %p30, 0, %s29
      %s32 = sadd.s32 1, %s21
      %s33 = scalar_select %p30, %s32, %s21
      %p34 = scmp.ge.s32.totalorder %s33, 1
      %s35 = scalar_select %p34, 0, %s33
      %s36 = sadd.s32 1, %s20
      %s37 = scalar_select %p34, %s36, %s20
      %p38 = scmp.ge.s32.totalorder %s37, 4
      %s39 = scalar_select %p38, 0, %s37
      %s40 = ssub.s32 %s20, %s39
      %s41 = ssub.s32 %s22, %s31
      %s42 = sor.u32 %s40, %s41
      %p43 = scmp.eq.s32.totalorder %s42, 0
      %s45 = sadd.s32 %s44, 1
      %s46 = scalar_select %p43, %s44, %s45
      %p49 = pneg %p43
      %p50 = scmp.eq.s32.totalorder %s13, 3
      %p51 = por %p49, %p50
      %p52 = scmp.ne.s32.totalorder %s44, %s47
      %p53 = scmp.eq.s32.totalorder %s13, 0
      %p54 = por %p52, %p53
      %p55 = scmp.ne.s32.totalorder %s44, %s47
      %p56 = scmp.eq.s32.totalorder %s18, 3
      %p57 = por %p55, %p56
      %p58 = scmp.ne.s32.totalorder %s47, %s48
      %p59 = scmp.eq.s32.totalorder %s18, 0
      %p60 = por %p58, %p59
      %p61 = scmp.ne.s32.totalorder %s47, %s48
      %p62 = scmp.eq.s32.totalorder %s19, 3
      %p63 = por %p61, %p62
      %p65 = scmp.ne.s32.totalorder %s48, %s64
      %p66 = scmp.eq.s32.totalorder %s19, 0
      %p67 = por %p65, %p66
      %s68 = ssub.s32 %s22, %s31
      %s69 = ssub.s32 %s21, %s35
      %s70 = sor.u32 %s68, %s69
      %p71 = scmp.eq.s32.totalorder %s70, 0
      %s73 = sadd.s32 %s72, 1
      %s74 = scalar_select %p71, %s72, %s73
      %p77 = pneg %p71
      %p78 = scmp.eq.s32.totalorder %s13, 3
      %p79 = por %p77, %p78
      %p80 = scmp.ne.s32.totalorder %s72, %s75
      %p81 = scmp.eq.s32.totalorder %s13, 0
      %p82 = por %p80, %p81
      %p83 = scmp.ne.s32.totalorder %s72, %s75
      %p84 = scmp.eq.s32.totalorder %s18, 3
      %p85 = por %p83, %p84
      %p86 = scmp.ne.s32.totalorder %s75, %s76
      %p87 = scmp.eq.s32.totalorder %s18, 0
      %p88 = por %p86, %p87
      %p89 = scmp.ne.s32.totalorder %s75, %s76
      %p90 = scmp.eq.s32.totalorder %s19, 3
      %p91 = por %p89, %p90
      %p93 = scmp.ne.s32.totalorder %s76, %s92
      %p94 = scmp.eq.s32.totalorder %s19, 0
      %p95 = por %p93, %p94
      %s96 = ssub.s32 %s21, %s35
      %p97 = scmp.eq.s32.totalorder %s96, 0
      %s99 = sadd.s32 %s98, 1
      %s100 = scalar_select %p97, %s98, %s99
      %p103 = pneg %p97
      %p104 = scmp.eq.s32.totalorder %s13, 3
      %p105 = por %p103, %p104
      %p106 = scmp.ne.s32.totalorder %s98, %s101
      %p107 = scmp.eq.s32.totalorder %s13, 0
      %p108 = por %p106, %p107
      %p109 = scmp.ne.s32.totalorder %s98, %s101
      %p110 = scmp.eq.s32.totalorder %s18, 3
      %p111 = por %p109, %p110
      %p112 = scmp.ne.s32.totalorder %s101, %s102
      %p113 = scmp.eq.s32.totalorder %s18, 0
      %p114 = por %p112, %p113
      %p115 = scmp.ne.s32.totalorder %s101, %s102
      %p116 = scmp.eq.s32.totalorder %s19, 3
      %p117 = por %p115, %p116
      %p119 = scmp.ne.s32.totalorder %s102, %s118
      %p120 = scmp.eq.s32.totalorder %s19, 0
      %p121 = por %p119, %p120
      %s122 = ssub.s32 %s21, %s35
      %p123 = scmp.eq.s32.totalorder %s122, 0
      %s125 = sadd.s32 %s124, 1
      %s126 = scalar_select %p123, %s124, %s125
      %p129 = pneg %p123
      %p130 = scmp.eq.s32.totalorder %s13, 3
      %p131 = por %p129, %p130
      %p132 = scmp.ne.s32.totalorder %s124, %s127
      %p133 = scmp.eq.s32.totalorder %s13, 0
      %p134 = por %p132, %p133
      %p135 = scmp.ne.s32.totalorder %s124, %s127
      %p136 = scmp.eq.s32.totalorder %s18, 3
      %p137 = por %p135, %p136
      %p138 = scmp.ne.s32.totalorder %s127, %s128
      %p139 = scmp.eq.s32.totalorder %s18, 0
      %p140 = por %p138, %p139
      %p141 = scmp.ne.s32.totalorder %s127, %s128
      %p142 = scmp.eq.s32.totalorder %s19, 3
      %p143 = por %p141, %p142
      %p145 = scmp.ne.s32.totalorder %s128, %s144
      %p146 = scmp.eq.s32.totalorder %s19, 0
      %p147 = por %p145, %p146
      %s148 = ssub.s32 %s20, %s39
      %s149 = ssub.s32 %s21, %s35
      %s150 = sor.u32 %s148, %s149
      %p151 = scmp.eq.s32.totalorder %s150, 0
      %s153 = sadd.s32 %s152, 1
      %s154 = scalar_select %p151, %s152, %s153
      %p157 = pneg %p151
      %p158 = scmp.eq.s32.totalorder %s13, 3
      %p159 = por %p157, %p158
      %p160 = scmp.ne.s32.totalorder %s152, %s155
      %p161 = scmp.eq.s32.totalorder %s13, 0
      %p162 = por %p160, %p161
      %p163 = scmp.ne.s32.totalorder %s152, %s155
      %p164 = scmp.eq.s32.totalorder %s18, 3
      %p165 = por %p163, %p164
      %p166 = scmp.ne.s32.totalorder %s155, %s156
      %p167 = scmp.eq.s32.totalorder %s18, 0
      %p168 = por %p166, %p167
      %p169 = scmp.ne.s32.totalorder %s155, %s156
      %p170 = scmp.eq.s32.totalorder %s19, 3
      %p171 = por %p169, %p170
      %p173 = scmp.ne.s32.totalorder %s156, %s172
      %p174 = scmp.eq.s32.totalorder %s19, 0
      %p175 = por %p173, %p174
      %p176 = scmp.le.s32.totalorder 1, %s13
      %p177 = scmp.lt.s32.totalorder %s13, 5
      %p178 = pnand %p176, %p177
      %p179 = pneg %p178
      // Predicated region
      $region9: #{tpu_custom_call.1} parent=5 // pred_check
        _
      $region10: #{tpu_custom_call.1} parent=5 // pred_check_branch
        %181 = sbr.rel (%p178) target = $region12
      $region11: #{tpu_custom_call.1} parent=5 // pred_region
        %s182 = ssub.s32 %s13, 1
        // Predicated region
        $region13: #{tpu_custom_call.1} parent=11 // pred_check
          %p183 = pneg %p88
        $region14: #{tpu_custom_call.1} parent=11 // pred_check_branch
          %185 = sbr.rel (%p183) target = $region16
        $region15: #{tpu_custom_call.1} parent=11 // pred_region
          %s186 = smul.u32 32, %s25
          %p187 = scmp.lt.s32.totalorder %s186, 31
          %s188 = scalar_select %p187, %s186, 31
          %p189 = scmp.lt.s32.totalorder %s24, 0
          %s190 = scalar_select %p189, %s24, 0
          %s191 = sadd.s32 %s190, %s188
          %s192 = smul.addr %s191, 4
          %s193 = scalar_lea.vmem %s1, %s192
          %s194 = smul.u32 32, %s25
        $region16: #{tpu_custom_call.1} parent=11 // pred_fallthru
          _
        // Predicated region
        $region17: #{tpu_custom_call.1} parent=11 // pred_check
          %p195 = pneg %p114
        $region18: #{tpu_custom_call.1} parent=11 // pred_check_branch
          %197 = sbr.rel (%p195) target = $region20
        $region19: #{tpu_custom_call.1} parent=11 // pred_region
          %p198 = scmp.lt.s32.totalorder %s24, 0
          %s199 = scalar_select %p198, %s24, 0
          %s200 = scalar_lea.vmem %s2, %s199
        $region20: #{tpu_custom_call.1} parent=11 // pred_fallthru
          _
        // Predicated region
        $region21: #{tpu_custom_call.1} parent=11 // pred_check
          %p201 = pneg %p140
        $region22: #{tpu_custom_call.1} parent=11 // pred_check_branch
          %203 = sbr.rel (%p201) target = $region24
        $region23: #{tpu_custom_call.1} parent=11 // pred_region
          %p204 = scmp.lt.s32.totalorder %s24, 0
          %s205 = scalar_select %p204, %s24, 0
          %s206 = scalar_lea.vmem %s3, %s205
        $region24: #{tpu_custom_call.1} parent=11 // pred_fallthru
          _
      $region12: #{tpu_custom_call.1} parent=5 // pred_fallthru
        _
      %p207 = scmp.lt.s32.totalorder %s13, 4
      // Predicated region
      $region25: #{tpu_custom_call.1} parent=5 // pred_check
        %p208 = pneg %p207
      $region26: #{tpu_custom_call.1} parent=5 // pred_check_branch
        %210 = sbr.rel (%p208) target = $region28
      $region27: #{tpu_custom_call.1} parent=5 // pred_region
        // Predicated region
        $region29: #{tpu_custom_call.1} parent=27 // pred_check
          %p211 = pneg %p54
        $region30: #{tpu_custom_call.1} parent=27 // pred_check_branch
          %213 = sbr.rel (%p211) target = $region32
        $region31: #{tpu_custom_call.1} parent=27 // pred_region
          %s214 = sand.u32 %s44, 1
          %s215 = scalar_lea.sflag [#allocation4], %s214
          %s216 = sand.u32 %s44, 1
          %s217 = smul.addr %s216, 512
          %s218 = scalar_lea.vmem [#allocation3], %s217
          %s219 = smul.u32 64, %s20
          %s220 = smul.u32 2, %s22
          %222 = vsyncadd %s215, 0
          %s223 = smul.addr %s219, 2
          %s224 = sadd.s32 %s220, %s223
          %s225 = smul.addr %s224, 4
          %s226 = scalar_lea.hbm %s0, %s225
          %s227 = sshll.u32 %s226, 4
          %s228 = int_to_ptr.hbm [resolvable:$true] %s227
          %s229 = sshll.u32 %s218, 4
          %s230 = int_to_ptr.vmem [resolvable:$true] %s229
          %235 = dma.hbm_to_vmem [thread:$0]  %s228, 8192, %s230, %s215, 128, 128, 8
        $region32: #{tpu_custom_call.1} parent=27 // pred_fallthru
          _
      $region28: #{tpu_custom_call.1} parent=5 // pred_fallthru
        _
      %p236 = scmp.le.s32.totalorder 1, %s13
      %p237 = scmp.lt.s32.totalorder %s13, 5
      %p238 = pnand %p236, %p237
      %p239 = pneg %p238
      // Predicated region
      $region33: #{tpu_custom_call.1} parent=5 // pred_check
        _
      $region34: #{tpu_custom_call.1} parent=5 // pred_check_branch
        %241 = sbr.rel (%p238) target = $region36
      $region35: #{tpu_custom_call.1} parent=5 // pred_region
        %s242 = ssub.s32 %s13, 1
        %s243 = sand.u32 %s47, 1
        %s244 = scalar_lea.sflag [#allocation4], %s243
        %s245 = sand.u32 %s47, 1
        %s246 = smul.addr %s245, 512
        %s247 = scalar_lea.vmem [#allocation3], %s246
        // Predicated region
        $region37: #{tpu_custom_call.1} parent=35 // pred_check
          %p248 = pneg %p60
        $region38: #{tpu_custom_call.1} parent=35 // pred_check_branch
          %250 = sbr.rel (%p248) target = $region40
        $region39: #{tpu_custom_call.1} parent=35 // pred_region
          %252 = dma.done %s244, 8192
        $region40: #{tpu_custom_call.1} parent=35 // pred_fallthru
          _
        %s253 = sand.u32 %s47, 1
        %s254 = scalar_lea.sflag [#allocation4], %s253
        %s255 = sand.u32 %s47, 1
        %s256 = smul.addr %s255, 512
        %s257 = scalar_lea.vmem [#allocation3], %s256
        %p258 = pneg %p60
        %p259 = pneg %p57
        %s260 = smul.u32 32, %s25
        %p261 = scmp.lt.s32.totalorder %s260, 31
        %s262 = scalar_select %p261, %s260, 31
        %p263 = scmp.lt.s32.totalorder %s24, 0
        %s264 = scalar_select %p263, %s24, 0
        %s265 = sadd.s32 %s264, %s262
        %s266 = smul.addr %s265, 4
        %s267 = scalar_lea.vmem %s1, %s266
        %p268 = pneg %p88
        %p269 = pneg %p85
        %p270 = scmp.lt.s32.totalorder %s24, 0
        %s271 = scalar_select %p270, %s24, 0
        %s272 = scalar_lea.vmem %s2, %s271
        %p273 = pneg %p114
        %p274 = pneg %p111
        %p275 = scmp.lt.s32.totalorder %s24, 0
        %s276 = scalar_select %p275, %s24, 0
        %s277 = scalar_lea.vmem %s3, %s276
        %p278 = pneg %p140
        %p279 = pneg %p137
        %p280 = pneg %p168
        %p281 = pneg %p165
        %s282 = smul.u32 64, %s23
        %p283 = scmp.lt.s32.totalorder %s282, 255
        %s284 = scalar_select %p283, %s282, 255
        %p285 = scmp.lt.s32.totalorder %s24, 0
        %s286 = scalar_select %p285, %s24, 0
        %s287 = sadd.s32 %s286, %s284
        %s288 = smul.addr %s287, 4
        %s289 = scalar_lea.vmem %s4, %s288
        %s290 = smul.u32 64, %s23
        %s291 = smul.u32 2, %s25
        %s292 = smul.u32 32, %s25
        %p293 = scmp.lt.s32.totalorder %s292, 31
        %s294 = scalar_select %p293, %s292, 31
        %p295 = scmp.lt.s32.totalorder %s24, 0
        %s296 = scalar_select %p295, %s24, 0
        %s297 = sadd.s32 %s296, %s294
        %s298 = smul.addr %s297, 4
        %s299 = scalar_lea.vmem %s1, %s298
        %s300 = smul.u32 32, %s25
        %p301 = scmp.lt.s32.totalorder %s24, 0
        %s302 = scalar_select %p301, %s24, 0
        %s303 = scalar_lea.vmem %s2, %s302
        %p304 = scmp.lt.s32.totalorder %s24, 0
        %s305 = scalar_select %p304, %s24, 0
        %s306 = scalar_lea.vmem %s3, %s305
        %s307 = smul.u32 64, %s23
        %p308 = scmp.lt.s32.totalorder %s307, 255
        %s309 = scalar_select %p308, %s307, 255
        %p310 = scmp.lt.s32.totalorder %s24, 0
        %s311 = scalar_select %p310, %s24, 0
        %s312 = sadd.s32 %s311, %s309
        %s313 = smul.addr %s312, 4
        %s314 = scalar_lea.vmem %s4, %s313
        %s315 = smul.u32 64, %s23
        %p316 = scmp.eq.s32.totalorder %s25, 0
        // Predicated region
        $region41: #{tpu_custom_call.1} parent=35 // pred_check
          %p317 = pneg %p316
        $region42: #{tpu_custom_call.1} parent=35 // pred_check_branch
          %319 = sbr.rel (%p317) target = $region44
        $region43: #{tpu_custom_call.1} parent=35 // pred_region
          %vm320 = vcmask 523264
          %321 = vst.msk [vmem:[#allocation2] sm:$0xff] %vm320, 0.0
          %322 = vst.msk [vmem:[#allocation2 + $0x8] sm:$0xff] %vm320, 0.0
          %323 = vst.msk [vmem:[#allocation2 + $0x10] sm:$0xff] %vm320, 0.0
          %324 = vst.msk [vmem:[#allocation2 + $0x18] sm:$0xff] %vm320, 0.0
          %325 = vst.msk [vmem:[#allocation2 + $0x20] sm:$0xff] %vm320, 0.0
          %326 = vst.msk [vmem:[#allocation2 + $0x28] sm:$0xff] %vm320, 0.0
          %327 = vst.msk [vmem:[#allocation2 + $0x30] sm:$0xff] %vm320, 0.0
          %328 = vst.msk [vmem:[#allocation2 + $0x38] sm:$0xff] %vm320, 0.0
          %329 = vst.msk [vmem:[#allocation2 + $0x40] sm:$0xff] %vm320, 0.0
          %330 = vst.msk [vmem:[#allocation2 + $0x48] sm:$0xff] %vm320, 0.0
          %331 = vst.msk [vmem:[#allocation2 + $0x50] sm:$0xff] %vm320, 0.0
          %332 = vst.msk [vmem:[#allocation2 + $0x58] sm:$0xff] %vm320, 0.0
          %333 = vst.msk [vmem:[#allocation2 + $0x60] sm:$0xff] %vm320, 0.0
          %334 = vst.msk [vmem:[#allocation2 + $0x68] sm:$0xff] %vm320, 0.0
          %335 = vst.msk [vmem:[#allocation2 + $0x70] sm:$0xff] %vm320, 0.0
          %336 = vst.msk [vmem:[#allocation2 + $0x78] sm:$0xff] %vm320, 0.0
          %337 = vst.msk [vmem:[#allocation2 + $0x80] sm:$0xff] %vm320, 0.0
          %338 = vst.msk [vmem:[#allocation2 + $0x88] sm:$0xff] %vm320, 0.0
          %339 = vst.msk [vmem:[#allocation2 + $0x90] sm:$0xff] %vm320, 0.0
          %340 = vst.msk [vmem:[#allocation2 + $0x98] sm:$0xff] %vm320, 0.0
          %341 = vst.msk [vmem:[#allocation2 + $0xa0] sm:$0xff] %vm320, 0.0
          %342 = vst.msk [vmem:[#allocation2 + $0xa8] sm:$0xff] %vm320, 0.0
          %343 = vst.msk [vmem:[#allocation2 + $0xb0] sm:$0xff] %vm320, 0.0
          %344 = vst.msk [vmem:[#allocation2 + $0xb8] sm:$0xff] %vm320, 0.0
          %345 = vst.msk [vmem:[#allocation2 + $0xc0] sm:$0xff] %vm320, 0.0
          %346 = vst.msk [vmem:[#allocation2 + $0xc8] sm:$0xff] %vm320, 0.0
          %347 = vst.msk [vmem:[#allocation2 + $0xd0] sm:$0xff] %vm320, 0.0
          %348 = vst.msk [vmem:[#allocation2 + $0xd8] sm:$0xff] %vm320, 0.0
          %349 = vst.msk [vmem:[#allocation2 + $0xe0] sm:$0xff] %vm320, 0.0
          %350 = vst.msk [vmem:[#allocation2 + $0xe8] sm:$0xff] %vm320, 0.0
          %351 = vst.msk [vmem:[#allocation2 + $0xf0] sm:$0xff] %vm320, 0.0
          %352 = vst.msk [vmem:[#allocation2 + $0xf8] sm:$0xff] %vm320, 0.0
          %353 = vst.msk [vmem:[#allocation2 + $0x100] sm:$0xff] %vm320, 0.0
          %354 = vst.msk [vmem:[#allocation2 + $0x108] sm:$0xff] %vm320, 0.0
          %355 = vst.msk [vmem:[#allocation2 + $0x110] sm:$0xff] %vm320, 0.0
          %356 = vst.msk [vmem:[#allocation2 + $0x118] sm:$0xff] %vm320, 0.0
          %357 = vst.msk [vmem:[#allocation2 + $0x120] sm:$0xff] %vm320, 0.0
          %358 = vst.msk [vmem:[#allocation2 + $0x128] sm:$0xff] %vm320, 0.0
          %359 = vst.msk [vmem:[#allocation2 + $0x130] sm:$0xff] %vm320, 0.0
          %360 = vst.msk [vmem:[#allocation2 + $0x138] sm:$0xff] %vm320, 0.0
          %361 = vst.msk [vmem:[#allocation2 + $0x140] sm:$0xff] %vm320, 0.0
          %362 = vst.msk [vmem:[#allocation2 + $0x148] sm:$0xff] %vm320, 0.0
          %363 = vst.msk [vmem:[#allocation2 + $0x150] sm:$0xff] %vm320, 0.0
          %364 = vst.msk [vmem:[#allocation2 + $0x158] sm:$0xff] %vm320, 0.0
          %365 = vst.msk [vmem:[#allocation2 + $0x160] sm:$0xff] %vm320, 0.0
          %366 = vst.msk [vmem:[#allocation2 + $0x168] sm:$0xff] %vm320, 0.0
          %367 = vst.msk [vmem:[#allocation2 + $0x170] sm:$0xff] %vm320, 0.0
          %368 = vst.msk [vmem:[#allocation2 + $0x178] sm:$0xff] %vm320, 0.0
          %369 = vst.msk [vmem:[#allocation2 + $0x180] sm:$0xff] %vm320, 0.0
          %370 = vst.msk [vmem:[#allocation2 + $0x188] sm:$0xff] %vm320, 0.0
          %371 = vst.msk [vmem:[#allocation2 + $0x190] sm:$0xff] %vm320, 0.0
          %372 = vst.msk [vmem:[#allocation2 + $0x198] sm:$0xff] %vm320, 0.0
          %373 = vst.msk [vmem:[#allocation2 + $0x1a0] sm:$0xff] %vm320, 0.0
          %374 = vst.msk [vmem:[#allocation2 + $0x1a8] sm:$0xff] %vm320, 0.0
          %375 = vst.msk [vmem:[#allocation2 + $0x1b0] sm:$0xff] %vm320, 0.0
          %376 = vst.msk [vmem:[#allocation2 + $0x1b8] sm:$0xff] %vm320, 0.0
          %377 = vst.msk [vmem:[#allocation2 + $0x1c0] sm:$0xff] %vm320, 0.0
          %378 = vst.msk [vmem:[#allocation2 + $0x1c8] sm:$0xff] %vm320, 0.0
          %379 = vst.msk [vmem:[#allocation2 + $0x1d0] sm:$0xff] %vm320, 0.0
          %380 = vst.msk [vmem:[#allocation2 + $0x1d8] sm:$0xff] %vm320, 0.0
          %381 = vst.msk [vmem:[#allocation2 + $0x1e0] sm:$0xff] %vm320, 0.0
          %382 = vst.msk [vmem:[#allocation2 + $0x1e8] sm:$0xff] %vm320, 0.0
          %383 = vst.msk [vmem:[#allocation2 + $0x1f0] sm:$0xff] %vm320, 0.0
          %384 = vst.msk [vmem:[#allocation2 + $0x1f8] sm:$0xff] %vm320, 0.0
        $region44: #{tpu_custom_call.1} parent=35 // pred_fallthru
          _
        %v385 = vld [vmem:[#allocation2] sm:$0xff]
        %v386 = vld [vmem:[#allocation2 + $0x8] sm:$0xff]
        %v387 = vld [vmem:[#allocation2 + $0x10] sm:$0xff]
        %v388 = vld [vmem:[#allocation2 + $0x18] sm:$0xff]
        %v389 = vld [vmem:[#allocation2 + $0x20] sm:$0xff]
        %v390 = vld [vmem:[#allocation2 + $0x28] sm:$0xff]
        %v391 = vld [vmem:[#allocation2 + $0x30] sm:$0xff]
        %v392 = vld [vmem:[#allocation2 + $0x38] sm:$0xff]
        %v393 = vld [vmem:[#allocation2 + $0x40] sm:$0xff]
        %v394 = vld [vmem:[#allocation2 + $0x48] sm:$0xff]
        %v395 = vld [vmem:[#allocation2 + $0x50] sm:$0xff]
        %v396 = vld [vmem:[#allocation2 + $0x58] sm:$0xff]
        %v397 = vld [vmem:[#allocation2 + $0x60] sm:$0xff]
        %v398 = vld [vmem:[#allocation2 + $0x68] sm:$0xff]
        %v399 = vld [vmem:[#allocation2 + $0x70] sm:$0xff]
        %v400 = vld [vmem:[#allocation2 + $0x78] sm:$0xff]
        %v401 = vld [vmem:[#allocation2 + $0x80] sm:$0xff]
        %v402 = vld [vmem:[#allocation2 + $0x88] sm:$0xff]
        %v403 = vld [vmem:[#allocation2 + $0x90] sm:$0xff]
        %v404 = vld [vmem:[#allocation2 + $0x98] sm:$0xff]
        %v405 = vld [vmem:[#allocation2 + $0xa0] sm:$0xff]
        %v406 = vld [vmem:[#allocation2 + $0xa8] sm:$0xff]
        %v407 = vld [vmem:[#allocation2 + $0xb0] sm:$0xff]
        %v408 = vld [vmem:[#allocation2 + $0xb8] sm:$0xff]
        %v409 = vld [vmem:[#allocation2 + $0xc0] sm:$0xff]
        %v410 = vld [vmem:[#allocation2 + $0xc8] sm:$0xff]
        %v411 = vld [vmem:[#allocation2 + $0xd0] sm:$0xff]
        %v412 = vld [vmem:[#allocation2 + $0xd8] sm:$0xff]
        %v413 = vld [vmem:[#allocation2 + $0xe0] sm:$0xff]
        %v414 = vld [vmem:[#allocation2 + $0xe8] sm:$0xff]
        %v415 = vld [vmem:[#allocation2 + $0xf0] sm:$0xff]
        %v416 = vld [vmem:[#allocation2 + $0xf8] sm:$0xff]
        %v417 = vld [vmem:[#allocation2 + $0x100] sm:$0xff]
        %v418 = vld [vmem:[#allocation2 + $0x108] sm:$0xff]
        %v419 = vld [vmem:[#allocation2 + $0x110] sm:$0xff]
        %v420 = vld [vmem:[#allocation2 + $0x118] sm:$0xff]
        %v421 = vld [vmem:[#allocation2 + $0x120] sm:$0xff]
        %v422 = vld [vmem:[#allocation2 + $0x128] sm:$0xff]
        %v423 = vld [vmem:[#allocation2 + $0x130] sm:$0xff]
        %v424 = vld [vmem:[#allocation2 + $0x138] sm:$0xff]
        %v425 = vld [vmem:[#allocation2 + $0x140] sm:$0xff]
        %v426 = vld [vmem:[#allocation2 + $0x148] sm:$0xff]
        %v427 = vld [vmem:[#allocation2 + $0x150] sm:$0xff]
        %v428 = vld [vmem:[#allocation2 + $0x158] sm:$0xff]
        %v429 = vld [vmem:[#allocation2 + $0x160] sm:$0xff]
        %v430 = vld [vmem:[#allocation2 + $0x168] sm:$0xff]
        %v431 = vld [vmem:[#allocation2 + $0x170] sm:$0xff]
        %v432 = vld [vmem:[#allocation2 + $0x178] sm:$0xff]
        %v433 = vld [vmem:[#allocation2 + $0x180] sm:$0xff]
        %v434 = vld [vmem:[#allocation2 + $0x188] sm:$0xff]
        %v435 = vld [vmem:[#allocation2 + $0x190] sm:$0xff]
        %v436 = vld [vmem:[#allocation2 + $0x198] sm:$0xff]
        %v437 = vld [vmem:[#allocation2 + $0x1a0] sm:$0xff]
        %v438 = vld [vmem:[#allocation2 + $0x1a8] sm:$0xff]
        %v439 = vld [vmem:[#allocation2 + $0x1b0] sm:$0xff]
        %v440 = vld [vmem:[#allocation2 + $0x1b8] sm:$0xff]
        %v441 = vld [vmem:[#allocation2 + $0x1c0] sm:$0xff]
        %v442 = vld [vmem:[#allocation2 + $0x1c8] sm:$0xff]
        %v443 = vld [vmem:[#allocation2 + $0x1d0] sm:$0xff]
        %v444 = vld [vmem:[#allocation2 + $0x1d8] sm:$0xff]
        %v445 = vld [vmem:[#allocation2 + $0x1e0] sm:$0xff]
        %v446 = vld [vmem:[#allocation2 + $0x1e8] sm:$0xff]
        %v447 = vld [vmem:[#allocation2 + $0x1f0] sm:$0xff]
        %v448 = vld [vmem:[#allocation2 + $0x1f8] sm:$0xff]
        %v449 = vld [vmem:[%s247] sm:$0xff]
        %v450 = vld [vmem:[%s247 + $0x8] sm:$0xff]
        %v451 = vld [vmem:[%s247 + $0x10] sm:$0xff]
        %v452 = vld [vmem:[%s247 + $0x18] sm:$0xff]
        %v453 = vld [vmem:[%s247 + $0x20] sm:$0xff]
        %v454 = vld [vmem:[%s247 + $0x28] sm:$0xff]
        %v455 = vld [vmem:[%s247 + $0x30] sm:$0xff]
        %v456 = vld [vmem:[%s247 + $0x38] sm:$0xff]
        %v457 = vld [vmem:[%s247 + $0x40] sm:$0xff]
        %v458 = vld [vmem:[%s247 + $0x48] sm:$0xff]
        %v459 = vld [vmem:[%s247 + $0x50] sm:$0xff]
        %v460 = vld [vmem:[%s247 + $0x58] sm:$0xff]
        %v461 = vld [vmem:[%s247 + $0x60] sm:$0xff]
        %v462 = vld [vmem:[%s247 + $0x68] sm:$0xff]
        %v463 = vld [vmem:[%s247 + $0x70] sm:$0xff]
        %v464 = vld [vmem:[%s247 + $0x78] sm:$0xff]
        %v465 = vld [vmem:[%s247 + $0x80] sm:$0xff]
        %v466 = vld [vmem:[%s247 + $0x88] sm:$0xff]
        %v467 = vld [vmem:[%s247 + $0x90] sm:$0xff]
        %v468 = vld [vmem:[%s247 + $0x98] sm:$0xff]
        %v469 = vld [vmem:[%s247 + $0xa0] sm:$0xff]
        %v470 = vld [vmem:[%s247 + $0xa8] sm:$0xff]
        %v471 = vld [vmem:[%s247 + $0xb0] sm:$0xff]
        %v472 = vld [vmem:[%s247 + $0xb8] sm:$0xff]
        %v473 = vld [vmem:[%s247 + $0xc0] sm:$0xff]
        %v474 = vld [vmem:[%s247 + $0xc8] sm:$0xff]
        %v475 = vld [vmem:[%s247 + $0xd0] sm:$0xff]
        %v476 = vld [vmem:[%s247 + $0xd8] sm:$0xff]
        %v477 = vld [vmem:[%s247 + $0xe0] sm:$0xff]
        %v478 = vld [vmem:[%s247 + $0xe8] sm:$0xff]
        %v479 = vld [vmem:[%s247 + $0xf0] sm:$0xff]
        %v480 = vld [vmem:[%s247 + $0xf8] sm:$0xff]
        %v481 = vld [vmem:[%s247 + $0x100] sm:$0xff]
        %v482 = vld [vmem:[%s247 + $0x108] sm:$0xff]
        %v483 = vld [vmem:[%s247 + $0x110] sm:$0xff]
        %v484 = vld [vmem:[%s247 + $0x118] sm:$0xff]
        %v485 = vld [vmem:[%s247 + $0x120] sm:$0xff]
        %v486 = vld [vmem:[%s247 + $0x128] sm:$0xff]
        %v487 = vld [vmem:[%s247 + $0x130] sm:$0xff]
        %v488 = vld [vmem:[%s247 + $0x138] sm:$0xff]
        %v489 = vld [vmem:[%s247 + $0x140] sm:$0xff]
        %v490 = vld [vmem:[%s247 + $0x148] sm:$0xff]
        %v491 = vld [vmem:[%s247 + $0x150] sm:$0xff]
        %v492 = vld [vmem:[%s247 + $0x158] sm:$0xff]
        %v493 = vld [vmem:[%s247 + $0x160] sm:$0xff]
        %v494 = vld [vmem:[%s247 + $0x168] sm:$0xff]
        %v495 = vld [vmem:[%s247 + $0x170] sm:$0xff]
        %v496 = vld [vmem:[%s247 + $0x178] sm:$0xff]
        %v497 = vld [vmem:[%s247 + $0x180] sm:$0xff]
        %v498 = vld [vmem:[%s247 + $0x188] sm:$0xff]
        %v499 = vld [vmem:[%s247 + $0x190] sm:$0xff]
        %v500 = vld [vmem:[%s247 + $0x198] sm:$0xff]
        %v501 = vld [vmem:[%s247 + $0x1a0] sm:$0xff]
        %v502 = vld [vmem:[%s247 + $0x1a8] sm:$0xff]
        %v503 = vld [vmem:[%s247 + $0x1b0] sm:$0xff]
        %v504 = vld [vmem:[%s247 + $0x1b8] sm:$0xff]
        %v505 = vld [vmem:[%s247 + $0x1c0] sm:$0xff]
        %v506 = vld [vmem:[%s247 + $0x1c8] sm:$0xff]
        %v507 = vld [vmem:[%s247 + $0x1d0] sm:$0xff]
        %v508 = vld [vmem:[%s247 + $0x1d8] sm:$0xff]
        %v509 = vld [vmem:[%s247 + $0x1e0] sm:$0xff]
        %v510 = vld [vmem:[%s247 + $0x1e8] sm:$0xff]
        %v511 = vld [vmem:[%s247 + $0x1f0] sm:$0xff]
        %v512 = vld [vmem:[%s247 + $0x1f8] sm:$0xff]
        %v513 = vld [vmem:[%s299] sm:$0xf]
        %v514 = vld [vmem:[%s299 + $0x4] sm:$0xf]
        %v515 = vld [vmem:[%s299 + $0x8] sm:$0xf]
        %v516 = vld [vmem:[%s299 + $0xc] sm:$0xf]
        %v517 = vld [vmem:[%s299 + $0x10] sm:$0xf]
        %v518 = vld [vmem:[%s299 + $0x14] sm:$0xf]
        %v519 = vld [vmem:[%s299 + $0x18] sm:$0xf]
        %v520 = vld [vmem:[%s299 + $0x1c] sm:$0xf]
        %v521 = vld [vmem:[%s299 + $0x20] sm:$0xf]
        %v522 = vld [vmem:[%s299 + $0x24] sm:$0xf]
        %v523 = vld [vmem:[%s299 + $0x28] sm:$0xf]
        %v524 = vld [vmem:[%s299 + $0x2c] sm:$0xf]
        %v525 = vld [vmem:[%s299 + $0x30] sm:$0xf]
        %v526 = vld [vmem:[%s299 + $0x34] sm:$0xf]
        %v527 = vld [vmem:[%s299 + $0x38] sm:$0xf]
        %v528 = vld [vmem:[%s299 + $0x3c] sm:$0xf]
        %v529 = vld [vmem:[%s299 + $0x40] sm:$0xf]
        %v530 = vld [vmem:[%s299 + $0x44] sm:$0xf]
        %v531 = vld [vmem:[%s299 + $0x48] sm:$0xf]
        %v532 = vld [vmem:[%s299 + $0x4c] sm:$0xf]
        %v533 = vld [vmem:[%s299 + $0x50] sm:$0xf]
        %v534 = vld [vmem:[%s299 + $0x54] sm:$0xf]
        %v535 = vld [vmem:[%s299 + $0x58] sm:$0xf]
        %v536 = vld [vmem:[%s299 + $0x5c] sm:$0xf]
        %v537 = vld [vmem:[%s299 + $0x60] sm:$0xf]
        %v538 = vld [vmem:[%s299 + $0x64] sm:$0xf]
        %v539 = vld [vmem:[%s299 + $0x68] sm:$0xf]
        %v540 = vld [vmem:[%s299 + $0x6c] sm:$0xf]
        %v541 = vld [vmem:[%s299 + $0x70] sm:$0xf]
        %v542 = vld [vmem:[%s299 + $0x74] sm:$0xf]
        %v543 = vld [vmem:[%s299 + $0x78] sm:$0xf]
        %v544 = vld [vmem:[%s299 + $0x7c] sm:$0xf]
        %v609 = vunpack.c.l.b16 %v449
        %v610 = vunpack.c.h.b16 %v449
        %v611 = vunpack.c.l.b16 %v450
        %v612 = vunpack.c.h.b16 %v450
        %v613 = vunpack.c.l.b16 %v451
        %v614 = vunpack.c.h.b16 %v451
        %v615 = vunpack.c.l.b16 %v452
        %v616 = vunpack.c.h.b16 %v452
        %v617 = vunpack.c.l.b16 %v453
        %v618 = vunpack.c.h.b16 %v453
        %v619 = vunpack.c.l.b16 %v454
        %v620 = vunpack.c.h.b16 %v454
        %v621 = vunpack.c.l.b16 %v455
        %v622 = vunpack.c.h.b16 %v455
        %v623 = vunpack.c.l.b16 %v456
        %v624 = vunpack.c.h.b16 %v456
        %v625 = vunpack.c.l.b16 %v457
        %v626 = vunpack.c.h.b16 %v457
        %v627 = vunpack.c.l.b16 %v458
        %v628 = vunpack.c.h.b16 %v458
        %v629 = vunpack.c.l.b16 %v459
        %v630 = vunpack.c.h.b16 %v459
        %v631 = vunpack.c.l.b16 %v460
        %v632 = vunpack.c.h.b16 %v460
        %v633 = vunpack.c.l.b16 %v461
        %v634 = vunpack.c.h.b16 %v461
        %v635 = vunpack.c.l.b16 %v462
        %v636 = vunpack.c.h.b16 %v462
        %v637 = vunpack.c.l.b16 %v463
        %v638 = vunpack.c.h.b16 %v463
        %v639 = vunpack.c.l.b16 %v464
        %v640 = vunpack.c.h.b16 %v464
        %v641 = vunpack.c.l.b16 %v465
        %v642 = vunpack.c.h.b16 %v465
        %v643 = vunpack.c.l.b16 %v466
        %v644 = vunpack.c.h.b16 %v466
        %v645 = vunpack.c.l.b16 %v467
        %v646 = vunpack.c.h.b16 %v467
        %v647 = vunpack.c.l.b16 %v468
        %v648 = vunpack.c.h.b16 %v468
        %v649 = vunpack.c.l.b16 %v469
        %v650 = vunpack.c.h.b16 %v469
        %v651 = vunpack.c.l.b16 %v470
        %v652 = vunpack.c.h.b16 %v470
        %v653 = vunpack.c.l.b16 %v471
        %v654 = vunpack.c.h.b16 %v471
        %v655 = vunpack.c.l.b16 %v472
        %v656 = vunpack.c.h.b16 %v472
        %v657 = vunpack.c.l.b16 %v473
        %v658 = vunpack.c.h.b16 %v473
        %v659 = vunpack.c.l.b16 %v474
        %v660 = vunpack.c.h.b16 %v474
        %v661 = vunpack.c.l.b16 %v475
        %v662 = vunpack.c.h.b16 %v475
        %v663 = vunpack.c.l.b16 %v476
        %v664 = vunpack.c.h.b16 %v476
        %v665 = vunpack.c.l.b16 %v477
        %v666 = vunpack.c.h.b16 %v477
        %v667 = vunpack.c.l.b16 %v478
        %v668 = vunpack.c.h.b16 %v478
        %v669 = vunpack.c.l.b16 %v479
        %v670 = vunpack.c.h.b16 %v479
        %v671 = vunpack.c.l.b16 %v480
        %v672 = vunpack.c.h.b16 %v480
        %v673 = vunpack.c.l.b16 %v481
        %v674 = vunpack.c.h.b16 %v481
        %v675 = vunpack.c.l.b16 %v482
        %v676 = vunpack.c.h.b16 %v482
        %v677 = vunpack.c.l.b16 %v483
        %v678 = vunpack.c.h.b16 %v483
        %v679 = vunpack.c.l.b16 %v484
        %v680 = vunpack.c.h.b16 %v484
        %v681 = vunpack.c.l.b16 %v485
        %v682 = vunpack.c.h.b16 %v485
        %v683 = vunpack.c.l.b16 %v486
        %v684 = vunpack.c.h.b16 %v486
        %v685 = vunpack.c.l.b16 %v487
        %v686 = vunpack.c.h.b16 %v487
        %v687 = vunpack.c.l.b16 %v488
        %v688 = vunpack.c.h.b16 %v488
        %v689 = vunpack.c.l.b16 %v489
        %v690 = vunpack.c.h.b16 %v489
        %v691 = vunpack.c.l.b16 %v490
        %v692 = vunpack.c.h.b16 %v490
        %v693 = vunpack.c.l.b16 %v491
        %v694 = vunpack.c.h.b16 %v491
        %v695 = vunpack.c.l.b16 %v492
        %v696 = vunpack.c.h.b16 %v492
        %v697 = vunpack.c.l.b16 %v493
        %v698 = vunpack.c.h.b16 %v493
        %v699 = vunpack.c.l.b16 %v494
        %v700 = vunpack.c.h.b16 %v494
        %v701 = vunpack.c.l.b16 %v495
        %v702 = vunpack.c.h.b16 %v495
        %v703 = vunpack.c.l.b16 %v496
        %v704 = vunpack.c.h.b16 %v496
        %v705 = vunpack.c.l.b16 %v497
        %v706 = vunpack.c.h.b16 %v497
        %v707 = vunpack.c.l.b16 %v498
        %v708 = vunpack.c.h.b16 %v498
        %v709 = vunpack.c.l.b16 %v499
        %v710 = vunpack.c.h.b16 %v499
        %v711 = vunpack.c.l.b16 %v500
        %v712 = vunpack.c.h.b16 %v500
        %v713 = vunpack.c.l.b16 %v501
        %v714 = vunpack.c.h.b16 %v501
        %v715 = vunpack.c.l.b16 %v502
        %v716 = vunpack.c.h.b16 %v502
        %v717 = vunpack.c.l.b16 %v503
        %v718 = vunpack.c.h.b16 %v503
        %v719 = vunpack.c.l.b16 %v504
        %v720 = vunpack.c.h.b16 %v504
        %v721 = vunpack.c.l.b16 %v505
        %v722 = vunpack.c.h.b16 %v505
        %v723 = vunpack.c.l.b16 %v506
        %v724 = vunpack.c.h.b16 %v506
        %v725 = vunpack.c.l.b16 %v507
        %v726 = vunpack.c.h.b16 %v507
        %v727 = vunpack.c.l.b16 %v508
        %v728 = vunpack.c.h.b16 %v508
        %v729 = vunpack.c.l.b16 %v509
        %v730 = vunpack.c.h.b16 %v509
        %v731 = vunpack.c.l.b16 %v510
        %v732 = vunpack.c.h.b16 %v510
        %v733 = vunpack.c.l.b16 %v511
        %v734 = vunpack.c.h.b16 %v511
        %v735 = vunpack.c.l.b16 %v512
        %v736 = vunpack.c.h.b16 %v512
        %v737 = vpack.c.b16 %v611, %v609
        %v738 = vpack.c.b16 %v612, %v610
        %v739 = vpack.c.b16 %v615, %v613
        %v740 = vpack.c.b16 %v616, %v614
        %v741 = vpack.c.b16 %v619, %v617
        %v742 = vpack.c.b16 %v620, %v618
        %v743 = vpack.c.b16 %v623, %v621
        %v744 = vpack.c.b16 %v624, %v622
        %v745 = vpack.c.b16 %v627, %v625
        %v746 = vpack.c.b16 %v628, %v626
        %v747 = vpack.c.b16 %v631, %v629
        %v748 = vpack.c.b16 %v632, %v630
        %v749 = vpack.c.b16 %v635, %v633
        %v750 = vpack.c.b16 %v636, %v634
        %v751 = vpack.c.b16 %v639, %v637
        %v752 = vpack.c.b16 %v640, %v638
        %v753 = vpack.c.b16 %v643, %v641
        %v754 = vpack.c.b16 %v644, %v642
        %v755 = vpack.c.b16 %v647, %v645
        %v756 = vpack.c.b16 %v648, %v646
        %v757 = vpack.c.b16 %v651, %v649
        %v758 = vpack.c.b16 %v652, %v650
        %v759 = vpack.c.b16 %v655, %v653
        %v760 = vpack.c.b16 %v656, %v654
        %v761 = vpack.c.b16 %v659, %v657
        %v762 = vpack.c.b16 %v660, %v658
        %v763 = vpack.c.b16 %v663, %v661
        %v764 = vpack.c.b16 %v664, %v662
        %v765 = vpack.c.b16 %v667, %v665
        %v766 = vpack.c.b16 %v668, %v666
        %v767 = vpack.c.b16 %v671, %v669
        %v768 = vpack.c.b16 %v672, %v670
        %v769 = vpack.c.b16 %v675, %v673
        %v770 = vpack.c.b16 %v676, %v674
        %v771 = vpack.c.b16 %v679, %v677
        %v772 = vpack.c.b16 %v680, %v678
        %v773 = vpack.c.b16 %v683, %v681
        %v774 = vpack.c.b16 %v684, %v682
        %v775 = vpack.c.b16 %v687, %v685
        %v776 = vpack.c.b16 %v688, %v686
        %v777 = vpack.c.b16 %v691, %v689
        %v778 = vpack.c.b16 %v692, %v690
        %v779 = vpack.c.b16 %v695, %v693
        %v780 = vpack.c.b16 %v696, %v694
        %v781 = vpack.c.b16 %v699, %v697
        %v782 = vpack.c.b16 %v700, %v698
        %v783 = vpack.c.b16 %v703, %v701
        %v784 = vpack.c.b16 %v704, %v702
        %v785 = vpack.c.b16 %v707, %v705
        %v786 = vpack.c.b16 %v708, %v706
        %v787 = vpack.c.b16 %v711, %v709
        %v788 = vpack.c.b16 %v712, %v710
        %v789 = vpack.c.b16 %v715, %v713
        %v790 = vpack.c.b16 %v716, %v714
        %v791 = vpack.c.b16 %v719, %v717
        %v792 = vpack.c.b16 %v720, %v718
        %v793 = vpack.c.b16 %v723, %v721
        %v794 = vpack.c.b16 %v724, %v722
        %v795 = vpack.c.b16 %v727, %v725
        %v796 = vpack.c.b16 %v728, %v726
        %v797 = vpack.c.b16 %v731, %v729
        %v798 = vpack.c.b16 %v732, %v730
        %v799 = vpack.c.b16 %v735, %v733
        %v800 = vpack.c.b16 %v736, %v734
        %v897 = vunpack.c.l.b16 %v513
        %v898 = vunpack.c.l.b16 %v514
        %v899 = vunpack.c.l.b16 %v515
        %v900 = vunpack.c.l.b16 %v516
        %v901 = vunpack.c.l.b16 %v517
        %v902 = vunpack.c.l.b16 %v518
        %v903 = vunpack.c.l.b16 %v519
        %v904 = vunpack.c.l.b16 %v520
        %v905 = vunpack.c.l.b16 %v521
        %v906 = vunpack.c.l.b16 %v522
        %v907 = vunpack.c.l.b16 %v523
        %v908 = vunpack.c.l.b16 %v524
        %v909 = vunpack.c.l.b16 %v525
        %v910 = vunpack.c.l.b16 %v526
        %v911 = vunpack.c.l.b16 %v527
        %v912 = vunpack.c.l.b16 %v528
        %v913 = vunpack.c.l.b16 %v529
        %v914 = vunpack.c.l.b16 %v530
        %v915 = vunpack.c.l.b16 %v531
        %v916 = vunpack.c.l.b16 %v532
        %v917 = vunpack.c.l.b16 %v533
        %v918 = vunpack.c.l.b16 %v534
        %v919 = vunpack.c.l.b16 %v535
        %v920 = vunpack.c.l.b16 %v536
        %v921 = vunpack.c.l.b16 %v537
        %v922 = vunpack.c.l.b16 %v538
        %v923 = vunpack.c.l.b16 %v539
        %v924 = vunpack.c.l.b16 %v540
        %v925 = vunpack.c.l.b16 %v541
        %v926 = vunpack.c.l.b16 %v542
        %v927 = vunpack.c.l.b16 %v543
        %v928 = vunpack.c.l.b16 %v544
        %v929 = vpack.c.b16 %v898, %v897
        %v930 = vpack.c.b16 %v900, %v899
        %v931 = vpack.c.b16 %v902, %v901
        %v932 = vpack.c.b16 %v904, %v903
        %v933 = vpack.c.b16 %v906, %v905
        %v934 = vpack.c.b16 %v908, %v907
        %v935 = vpack.c.b16 %v910, %v909
        %v936 = vpack.c.b16 %v912, %v911
        %v937 = vpack.c.b16 %v914, %v913
        %v938 = vpack.c.b16 %v916, %v915
        %v939 = vpack.c.b16 %v918, %v917
        %v940 = vpack.c.b16 %v920, %v919
        %v941 = vpack.c.b16 %v922, %v921
        %v942 = vpack.c.b16 %v924, %v923
        %v943 = vpack.c.b16 %v926, %v925
        %v944 = vpack.c.b16 %v928, %v927
        %961 = vmatpush.bf16.msra.mxu0 %v936
        %962 = vmatpush.bf16.msra.mxu0 %v935
        %963 = vmatpush.bf16.msra.mxu0 %v934
        %964 = vmatpush.bf16.msra.mxu0 %v933
        %965 = vmatpush.bf16.msra.mxu0 %v932
        %966 = vmatpush.bf16.msra.mxu0 %v931
        %967 = vmatpush.bf16.msra.mxu0 %v930
        %968 = vmatpush.bf16.msra.mxu0 %v929
        %969 = vmatmul.bf16.gmra.mxu0 %v737
        %v970 = vpop.f32.mrf.mxu0
        %v971 = vadd.f32 0.0, %v970
        %v972 = vpop.f32.mrf.mxu0
        %v973 = vadd.f32 0.0, %v972
        %974 = vmatmul.bf16.gmra.mxu0 %v739
        %v975 = vpop.f32.mrf.mxu0
        %v976 = vadd.f32 0.0, %v975
        %v977 = vpop.f32.mrf.mxu0
        %v978 = vadd.f32 0.0, %v977
        %979 = vmatmul.bf16.gmra.mxu0 %v741
        %v980 = vpop.f32.mrf.mxu0
        %v981 = vadd.f32 0.0, %v980
        %v982 = vpop.f32.mrf.mxu0
        %v983 = vadd.f32 0.0, %v982
        %984 = vmatmul.bf16.gmra.mxu0 %v743
        %v985 = vpop.f32.mrf.mxu0
        %v986 = vadd.f32 0.0, %v985
        %v987 = vpop.f32.mrf.mxu0
        %v988 = vadd.f32 0.0, %v987
        %989 = vmatmul.bf16.gmra.mxu0 %v745
        %v990 = vpop.f32.mrf.mxu0
        %v991 = vadd.f32 0.0, %v990
        %v992 = vpop.f32.mrf.mxu0
        %v993 = vadd.f32 0.0, %v992
        %994 = vmatmul.bf16.gmra.mxu0 %v747
        %v995 = vpop.f32.mrf.mxu0
        %v996 = vadd.f32 0.0, %v995
        %v997 = vpop.f32.mrf.mxu0
        %v998 = vadd.f32 0.0, %v997
        %999 = vmatmul.bf16.gmra.mxu0 %v749
        %v1000 = vpop.f32.mrf.mxu0
        %v1001 = vadd.f32 0.0, %v1000
        %v1002 = vpop.f32.mrf.mxu0
        %v1003 = vadd.f32 0.0, %v1002
        %1004 = vmatmul.bf16.gmra.mxu0 %v751
        %v1005 = vpop.f32.mrf.mxu0
        %v1006 = vadd.f32 0.0, %v1005
        %v1007 = vpop.f32.mrf.mxu0
        %v1008 = vadd.f32 0.0, %v1007
        %1009 = vmatmul.bf16.gmra.mxu0 %v753
        %v1010 = vpop.f32.mrf.mxu0
        %v1011 = vadd.f32 0.0, %v1010
        %v1012 = vpop.f32.mrf.mxu0
        %v1013 = vadd.f32 0.0, %v1012
        %1014 = vmatmul.bf16.gmra.mxu0 %v755
        %v1015 = vpop.f32.mrf.mxu0
        %v1016 = vadd.f32 0.0, %v1015
        %v1017 = vpop.f32.mrf.mxu0
        %v1018 = vadd.f32 0.0, %v1017
        %1019 = vmatmul.bf16.gmra.mxu0 %v757
        %v1020 = vpop.f32.mrf.mxu0
        %v1021 = vadd.f32 0.0, %v1020
        %v1022 = vpop.f32.mrf.mxu0
        %v1023 = vadd.f32 0.0, %v1022
        %1024 = vmatmul.bf16.gmra.mxu0 %v759
        %v1025 = vpop.f32.mrf.mxu0
        %v1026 = vadd.f32 0.0, %v1025
        %v1027 = vpop.f32.mrf.mxu0
        %v1028 = vadd.f32 0.0, %v1027
        %1029 = vmatmul.bf16.gmra.mxu0 %v761
        %v1030 = vpop.f32.mrf.mxu0
        %v1031 = vadd.f32 0.0, %v1030
        %v1032 = vpop.f32.mrf.mxu0
        %v1033 = vadd.f32 0.0, %v1032
        %1034 = vmatmul.bf16.gmra.mxu0 %v763
        %v1035 = vpop.f32.mrf.mxu0
        %v1036 = vadd.f32 0.0, %v1035
        %v1037 = vpop.f32.mrf.mxu0
        %v1038 = vadd.f32 0.0, %v1037
        %1039 = vmatmul.bf16.gmra.mxu0 %v765
        %v1040 = vpop.f32.mrf.mxu0
        %v1041 = vadd.f32 0.0, %v1040
        %v1042 = vpop.f32.mrf.mxu0
        %v1043 = vadd.f32 0.0, %v1042
        %1044 = vmatmul.bf16.gmra.mxu0 %v767
        %v1045 = vpop.f32.mrf.mxu0
        %v1046 = vadd.f32 0.0, %v1045
        %v1047 = vpop.f32.mrf.mxu0
        %v1048 = vadd.f32 0.0, %v1047
        %1049 = vmatmul.bf16.gmra.mxu0 %v769
        %v1050 = vpop.f32.mrf.mxu0
        %v1051 = vadd.f32 0.0, %v1050
        %v1052 = vpop.f32.mrf.mxu0
        %v1053 = vadd.f32 0.0, %v1052
        %1054 = vmatmul.bf16.gmra.mxu0 %v771
        %v1055 = vpop.f32.mrf.mxu0
        %v1056 = vadd.f32 0.0, %v1055
        %v1057 = vpop.f32.mrf.mxu0
        %v1058 = vadd.f32 0.0, %v1057
        %1059 = vmatmul.bf16.gmra.mxu0 %v773
        %v1060 = vpop.f32.mrf.mxu0
        %v1061 = vadd.f32 0.0, %v1060
        %v1062 = vpop.f32.mrf.mxu0
        %v1063 = vadd.f32 0.0, %v1062
        %1064 = vmatmul.bf16.gmra.mxu0 %v775
        %v1065 = vpop.f32.mrf.mxu0
        %v1066 = vadd.f32 0.0, %v1065
        %v1067 = vpop.f32.mrf.mxu0
        %v1068 = vadd.f32 0.0, %v1067
        %1069 = vmatmul.bf16.gmra.mxu0 %v777
        %v1070 = vpop.f32.mrf.mxu0
        %v1071 = vadd.f32 0.0, %v1070
        %v1072 = vpop.f32.mrf.mxu0
        %v1073 = vadd.f32 0.0, %v1072
        %1074 = vmatmul.bf16.gmra.mxu0 %v779
        %v1075 = vpop.f32.mrf.mxu0
        %v1076 = vadd.f32 0.0, %v1075
        %v1077 = vpop.f32.mrf.mxu0
        %v1078 = vadd.f32 0.0, %v1077
        %1079 = vmatmul.bf16.gmra.mxu0 %v781
        %v1080 = vpop.f32.mrf.mxu0
        %v1081 = vadd.f32 0.0, %v1080
        %v1082 = vpop.f32.mrf.mxu0
        %v1083 = vadd.f32 0.0, %v1082
        %1084 = vmatmul.bf16.gmra.mxu0 %v783
        %v1085 = vpop.f32.mrf.mxu0
        %v1086 = vadd.f32 0.0, %v1085
        %v1087 = vpop.f32.mrf.mxu0
        %v1088 = vadd.f32 0.0, %v1087
        %1089 = vmatmul.bf16.gmra.mxu0 %v785
        %v1090 = vpop.f32.mrf.mxu0
        %v1091 = vadd.f32 0.0, %v1090
        %v1092 = vpop.f32.mrf.mxu0
        %v1093 = vadd.f32 0.0, %v1092
        %1094 = vmatmul.bf16.gmra.mxu0 %v787
        %v1095 = vpop.f32.mrf.mxu0
        %v1096 = vadd.f32 0.0, %v1095
        %v1097 = vpop.f32.mrf.mxu0
        %v1098 = vadd.f32 0.0, %v1097
        %1099 = vmatmul.bf16.gmra.mxu0 %v789
        %v1100 = vpop.f32.mrf.mxu0
        %v1101 = vadd.f32 0.0, %v1100
        %v1102 = vpop.f32.mrf.mxu0
        %v1103 = vadd.f32 0.0, %v1102
        %1104 = vmatmul.bf16.gmra.mxu0 %v791
        %v1105 = vpop.f32.mrf.mxu0
        %v1106 = vadd.f32 0.0, %v1105
        %v1107 = vpop.f32.mrf.mxu0
        %v1108 = vadd.f32 0.0, %v1107
        %1109 = vmatmul.bf16.gmra.mxu0 %v793
        %v1110 = vpop.f32.mrf.mxu0
        %v1111 = vadd.f32 0.0, %v1110
        %v1112 = vpop.f32.mrf.mxu0
        %v1113 = vadd.f32 0.0, %v1112
        %1114 = vmatmul.bf16.gmra.mxu0 %v795
        %v1115 = vpop.f32.mrf.mxu0
        %v1116 = vadd.f32 0.0, %v1115
        %v1117 = vpop.f32.mrf.mxu0
        %v1118 = vadd.f32 0.0, %v1117
        %1119 = vmatmul.bf16.gmra.mxu0 %v797
        %v1120 = vpop.f32.mrf.mxu0
        %v1121 = vadd.f32 0.0, %v1120
        %v1122 = vpop.f32.mrf.mxu0
        %v1123 = vadd.f32 0.0, %v1122
        %1124 = vmatmul.bf16.gmra.mxu0 %v799
        %v1125 = vpop.f32.mrf.mxu0
        %v1126 = vadd.f32 0.0, %v1125
        %v1127 = vpop.f32.mrf.mxu0
        %v1128 = vadd.f32 0.0, %v1127
        %1129 = vdwg.mxu0
        %1130 = vmatpush.bf16.msra.mxu0 %v944
        %1131 = vmatpush.bf16.msra.mxu0 %v943
        %1132 = vmatpush.bf16.msra.mxu0 %v942
        %1133 = vmatpush.bf16.msra.mxu0 %v941
        %1134 = vmatpush.bf16.msra.mxu0 %v940
        %1135 = vmatpush.bf16.msra.mxu0 %v939
        %1136 = vmatpush.bf16.msra.mxu0 %v938
        %1137 = vmatpush.bf16.msra.mxu0 %v937
        %1138 = vmatmul.bf16.gmra.mxu0 %v738
        %v1139 = vpop.f32.mrf.mxu0
        %v1140 = vadd.f32 %v971, %v1139
        %v1141 = vpop.f32.mrf.mxu0
        %v1142 = vadd.f32 %v973, %v1141
        %1143 = vmatmul.bf16.gmra.mxu0 %v740
        %v1144 = vpop.f32.mrf.mxu0
        %v1145 = vadd.f32 %v976, %v1144
        %v1146 = vpop.f32.mrf.mxu0
        %v1147 = vadd.f32 %v978, %v1146
        %1148 = vmatmul.bf16.gmra.mxu0 %v742
        %v1149 = vpop.f32.mrf.mxu0
        %v1150 = vadd.f32 %v981, %v1149
        %v1151 = vpop.f32.mrf.mxu0
        %v1152 = vadd.f32 %v983, %v1151
        %1153 = vmatmul.bf16.gmra.mxu0 %v744
        %v1154 = vpop.f32.mrf.mxu0
        %v1155 = vadd.f32 %v986, %v1154
        %v1156 = vpop.f32.mrf.mxu0
        %v1157 = vadd.f32 %v988, %v1156
        %1158 = vmatmul.bf16.gmra.mxu0 %v746
        %v1159 = vpop.f32.mrf.mxu0
        %v1160 = vadd.f32 %v991, %v1159
        %v1161 = vpop.f32.mrf.mxu0
        %v1162 = vadd.f32 %v993, %v1161
        %1163 = vmatmul.bf16.gmra.mxu0 %v748
        %v1164 = vpop.f32.mrf.mxu0
        %v1165 = vadd.f32 %v996, %v1164
        %v1166 = vpop.f32.mrf.mxu0
        %v1167 = vadd.f32 %v998, %v1166
        %1168 = vmatmul.bf16.gmra.mxu0 %v750
        %v1169 = vpop.f32.mrf.mxu0
        %v1170 = vadd.f32 %v1001, %v1169
        %v1171 = vpop.f32.mrf.mxu0
        %v1172 = vadd.f32 %v1003, %v1171
        %1173 = vmatmul.bf16.gmra.mxu0 %v752
        %v1174 = vpop.f32.mrf.mxu0
        %v1175 = vadd.f32 %v1006, %v1174
        %v1176 = vpop.f32.mrf.mxu0
        %v1177 = vadd.f32 %v1008, %v1176
        %1178 = vmatmul.bf16.gmra.mxu0 %v754
        %v1179 = vpop.f32.mrf.mxu0
        %v1180 = vadd.f32 %v1011, %v1179
        %v1181 = vpop.f32.mrf.mxu0
        %v1182 = vadd.f32 %v1013, %v1181
        %1183 = vmatmul.bf16.gmra.mxu0 %v756
        %v1184 = vpop.f32.mrf.mxu0
        %v1185 = vadd.f32 %v1016, %v1184
        %v1186 = vpop.f32.mrf.mxu0
        %v1187 = vadd.f32 %v1018, %v1186
        %1188 = vmatmul.bf16.gmra.mxu0 %v758
        %v1189 = vpop.f32.mrf.mxu0
        %v1190 = vadd.f32 %v1021, %v1189
        %v1191 = vpop.f32.mrf.mxu0
        %v1192 = vadd.f32 %v1023, %v1191
        %1193 = vmatmul.bf16.gmra.mxu0 %v760
        %v1194 = vpop.f32.mrf.mxu0
        %v1195 = vadd.f32 %v1026, %v1194
        %v1196 = vpop.f32.mrf.mxu0
        %v1197 = vadd.f32 %v1028, %v1196
        %1198 = vmatmul.bf16.gmra.mxu0 %v762
        %v1199 = vpop.f32.mrf.mxu0
        %v1200 = vadd.f32 %v1031, %v1199
        %v1201 = vpop.f32.mrf.mxu0
        %v1202 = vadd.f32 %v1033, %v1201
        %1203 = vmatmul.bf16.gmra.mxu0 %v764
        %v1204 = vpop.f32.mrf.mxu0
        %v1205 = vadd.f32 %v1036, %v1204
        %v1206 = vpop.f32.mrf.mxu0
        %v1207 = vadd.f32 %v1038, %v1206
        %1208 = vmatmul.bf16.gmra.mxu0 %v766
        %v1209 = vpop.f32.mrf.mxu0
        %v1210 = vadd.f32 %v1041, %v1209
        %v1211 = vpop.f32.mrf.mxu0
        %v1212 = vadd.f32 %v1043, %v1211
        %1213 = vmatmul.bf16.gmra.mxu0 %v768
        %v1214 = vpop.f32.mrf.mxu0
        %v1215 = vadd.f32 %v1046, %v1214
        %v1216 = vpop.f32.mrf.mxu0
        %v1217 = vadd.f32 %v1048, %v1216
        %1218 = vmatmul.bf16.gmra.mxu0 %v770
        %v1219 = vpop.f32.mrf.mxu0
        %v1220 = vadd.f32 %v1051, %v1219
        %v1221 = vpop.f32.mrf.mxu0
        %v1222 = vadd.f32 %v1053, %v1221
        %1223 = vmatmul.bf16.gmra.mxu0 %v772
        %v1224 = vpop.f32.mrf.mxu0
        %v1225 = vadd.f32 %v1056, %v1224
        %v1226 = vpop.f32.mrf.mxu0
        %v1227 = vadd.f32 %v1058, %v1226
        %1228 = vmatmul.bf16.gmra.mxu0 %v774
        %v1229 = vpop.f32.mrf.mxu0
        %v1230 = vadd.f32 %v1061, %v1229
        %v1231 = vpop.f32.mrf.mxu0
        %v1232 = vadd.f32 %v1063, %v1231
        %1233 = vmatmul.bf16.gmra.mxu0 %v776
        %v1234 = vpop.f32.mrf.mxu0
        %v1235 = vadd.f32 %v1066, %v1234
        %v1236 = vpop.f32.mrf.mxu0
        %v1237 = vadd.f32 %v1068, %v1236
        %1238 = vmatmul.bf16.gmra.mxu0 %v778
        %v1239 = vpop.f32.mrf.mxu0
        %v1240 = vadd.f32 %v1071, %v1239
        %v1241 = vpop.f32.mrf.mxu0
        %v1242 = vadd.f32 %v1073, %v1241
        %1243 = vmatmul.bf16.gmra.mxu0 %v780
        %v1244 = vpop.f32.mrf.mxu0
        %v1245 = vadd.f32 %v1076, %v1244
        %v1246 = vpop.f32.mrf.mxu0
        %v1247 = vadd.f32 %v1078, %v1246
        %1248 = vmatmul.bf16.gmra.mxu0 %v782
        %v1249 = vpop.f32.mrf.mxu0
        %v1250 = vadd.f32 %v1081, %v1249
        %v1251 = vpop.f32.mrf.mxu0
        %v1252 = vadd.f32 %v1083, %v1251
        %1253 = vmatmul.bf16.gmra.mxu0 %v784
        %v1254 = vpop.f32.mrf.mxu0
        %v1255 = vadd.f32 %v1086, %v1254
        %v1256 = vpop.f32.mrf.mxu0
        %v1257 = vadd.f32 %v1088, %v1256
        %1258 = vmatmul.bf16.gmra.mxu0 %v786
        %v1259 = vpop.f32.mrf.mxu0
        %v1260 = vadd.f32 %v1091, %v1259
        %v1261 = vpop.f32.mrf.mxu0
        %v1262 = vadd.f32 %v1093, %v1261
        %1263 = vmatmul.bf16.gmra.mxu0 %v788
        %v1264 = vpop.f32.mrf.mxu0
        %v1265 = vadd.f32 %v1096, %v1264
        %v1266 = vpop.f32.mrf.mxu0
        %v1267 = vadd.f32 %v1098, %v1266
        %1268 = vmatmul.bf16.gmra.mxu0 %v790
        %v1269 = vpop.f32.mrf.mxu0
        %v1270 = vadd.f32 %v1101, %v1269
        %v1271 = vpop.f32.mrf.mxu0
        %v1272 = vadd.f32 %v1103, %v1271
        %1273 = vmatmul.bf16.gmra.mxu0 %v792
        %v1274 = vpop.f32.mrf.mxu0
        %v1275 = vadd.f32 %v1106, %v1274
        %v1276 = vpop.f32.mrf.mxu0
        %v1277 = vadd.f32 %v1108, %v1276
        %1278 = vmatmul.bf16.gmra.mxu0 %v794
        %v1279 = vpop.f32.mrf.mxu0
        %v1280 = vadd.f32 %v1111, %v1279
        %v1281 = vpop.f32.mrf.mxu0
        %v1282 = vadd.f32 %v1113, %v1281
        %1283 = vmatmul.bf16.gmra.mxu0 %v796
        %v1284 = vpop.f32.mrf.mxu0
        %v1285 = vadd.f32 %v1116, %v1284
        %v1286 = vpop.f32.mrf.mxu0
        %v1287 = vadd.f32 %v1118, %v1286
        %1288 = vmatmul.bf16.gmra.mxu0 %v798
        %v1289 = vpop.f32.mrf.mxu0
        %v1290 = vadd.f32 %v1121, %v1289
        %v1291 = vpop.f32.mrf.mxu0
        %v1292 = vadd.f32 %v1123, %v1291
        %1293 = vmatmul.bf16.gmra.mxu0 %v800
        %v1294 = vpop.f32.mrf.mxu0
        %v1295 = vadd.f32 %v1126, %v1294
        %v1296 = vpop.f32.mrf.mxu0
        %v1297 = vadd.f32 %v1128, %v1296
        %1298 = vdwg.mxu0
        %v1299 = vadd.f32 %v385, %v1140
        %v1300 = vadd.f32 %v386, %v1142
        %v1301 = vadd.f32 %v387, %v1145
        %v1302 = vadd.f32 %v388, %v1147
        %v1303 = vadd.f32 %v389, %v1150
        %v1304 = vadd.f32 %v390, %v1152
        %v1305 = vadd.f32 %v391, %v1155
        %v1306 = vadd.f32 %v392, %v1157
        %v1307 = vadd.f32 %v393, %v1160
        %v1308 = vadd.f32 %v394, %v1162
        %v1309 = vadd.f32 %v395, %v1165
        %v1310 = vadd.f32 %v396, %v1167
        %v1311 = vadd.f32 %v397, %v1170
        %v1312 = vadd.f32 %v398, %v1172
        %v1313 = vadd.f32 %v399, %v1175
        %v1314 = vadd.f32 %v400, %v1177
        %v1315 = vadd.f32 %v401, %v1180
        %v1316 = vadd.f32 %v402, %v1182
        %v1317 = vadd.f32 %v403, %v1185
        %v1318 = vadd.f32 %v404, %v1187
        %v1319 = vadd.f32 %v405, %v1190
        %v1320 = vadd.f32 %v406, %v1192
        %v1321 = vadd.f32 %v407, %v1195
        %v1322 = vadd.f32 %v408, %v1197
        %v1323 = vadd.f32 %v409, %v1200
        %v1324 = vadd.f32 %v410, %v1202
        %v1325 = vadd.f32 %v411, %v1205
        %v1326 = vadd.f32 %v412, %v1207
        %v1327 = vadd.f32 %v413, %v1210
        %v1328 = vadd.f32 %v414, %v1212
        %v1329 = vadd.f32 %v415, %v1215
        %v1330 = vadd.f32 %v416, %v1217
        %v1331 = vadd.f32 %v417, %v1220
        %v1332 = vadd.f32 %v418, %v1222
        %v1333 = vadd.f32 %v419, %v1225
        %v1334 = vadd.f32 %v420, %v1227
        %v1335 = vadd.f32 %v421, %v1230
        %v1336 = vadd.f32 %v422, %v1232
        %v1337 = vadd.f32 %v423, %v1235
        %v1338 = vadd.f32 %v424, %v1237
        %v1339 = vadd.f32 %v425, %v1240
        %v1340 = vadd.f32 %v426, %v1242
        %v1341 = vadd.f32 %v427, %v1245
        %v1342 = vadd.f32 %v428, %v1247
        %v1343 = vadd.f32 %v429, %v1250
        %v1344 = vadd.f32 %v430, %v1252
        %v1345 = vadd.f32 %v431, %v1255
        %v1346 = vadd.f32 %v432, %v1257
        %v1347 = vadd.f32 %v433, %v1260
        %v1348 = vadd.f32 %v434, %v1262
        %v1349 = vadd.f32 %v435, %v1265
        %v1350 = vadd.f32 %v436, %v1267
        %v1351 = vadd.f32 %v437, %v1270
        %v1352 = vadd.f32 %v438, %v1272
        %v1353 = vadd.f32 %v439, %v1275
        %v1354 = vadd.f32 %v440, %v1277
        %v1355 = vadd.f32 %v441, %v1280
        %v1356 = vadd.f32 %v442, %v1282
        %v1357 = vadd.f32 %v443, %v1285
        %v1358 = vadd.f32 %v444, %v1287
        %v1359 = vadd.f32 %v445, %v1290
        %v1360 = vadd.f32 %v446, %v1292
        %v1361 = vadd.f32 %v447, %v1295
        %v1362 = vadd.f32 %v448, %v1297
        %vm1363 = vcmask 523264
        %1364 = vst.msk [vmem:[#allocation2] sm:$0xff] %vm1363, %v1299
        %1365 = vst.msk [vmem:[#allocation2 + $0x8] sm:$0xff] %vm1363, %v1300
        %1366 = vst.msk [vmem:[#allocation2 + $0x10] sm:$0xff] %vm1363, %v1301
        %1367 = vst.msk [vmem:[#allocation2 + $0x18] sm:$0xff] %vm1363, %v1302
        %1368 = vst.msk [vmem:[#allocation2 + $0x20] sm:$0xff] %vm1363, %v1303
        %1369 = vst.msk [vmem:[#allocation2 + $0x28] sm:$0xff] %vm1363, %v1304
        %1370 = vst.msk [vmem:[#allocation2 + $0x30] sm:$0xff] %vm1363, %v1305
        %1371 = vst.msk [vmem:[#allocation2 + $0x38] sm:$0xff] %vm1363, %v1306
        %1372 = vst.msk [vmem:[#allocation2 + $0x40] sm:$0xff] %vm1363, %v1307
        %1373 = vst.msk [vmem:[#allocation2 + $0x48] sm:$0xff] %vm1363, %v1308
        %1374 = vst.msk [vmem:[#allocation2 + $0x50] sm:$0xff] %vm1363, %v1309
        %1375 = vst.msk [vmem:[#allocation2 + $0x58] sm:$0xff] %vm1363, %v1310
        %1376 = vst.msk [vmem:[#allocation2 + $0x60] sm:$0xff] %vm1363, %v1311
        %1377 = vst.msk [vmem:[#allocation2 + $0x68] sm:$0xff] %vm1363, %v1312
        %1378 = vst.msk [vmem:[#allocation2 + $0x70] sm:$0xff] %vm1363, %v1313
        %1379 = vst.msk [vmem:[#allocation2 + $0x78] sm:$0xff] %vm1363, %v1314
        %1380 = vst.msk [vmem:[#allocation2 + $0x80] sm:$0xff] %vm1363, %v1315
        %1381 = vst.msk [vmem:[#allocation2 + $0x88] sm:$0xff] %vm1363, %v1316
        %1382 = vst.msk [vmem:[#allocation2 + $0x90] sm:$0xff] %vm1363, %v1317
        %1383 = vst.msk [vmem:[#allocation2 + $0x98] sm:$0xff] %vm1363, %v1318
        %1384 = vst.msk [vmem:[#allocation2 + $0xa0] sm:$0xff] %vm1363, %v1319
        %1385 = vst.msk [vmem:[#allocation2 + $0xa8] sm:$0xff] %vm1363, %v1320
        %1386 = vst.msk [vmem:[#allocation2 + $0xb0] sm:$0xff] %vm1363, %v1321
        %1387 = vst.msk [vmem:[#allocation2 + $0xb8] sm:$0xff] %vm1363, %v1322
        %1388 = vst.msk [vmem:[#allocation2 + $0xc0] sm:$0xff] %vm1363, %v1323
        %1389 = vst.msk [vmem:[#allocation2 + $0xc8] sm:$0xff] %vm1363, %v1324
        %1390 = vst.msk [vmem:[#allocation2 + $0xd0] sm:$0xff] %vm1363, %v1325
        %1391 = vst.msk [vmem:[#allocation2 + $0xd8] sm:$0xff] %vm1363, %v1326
        %1392 = vst.msk [vmem:[#allocation2 + $0xe0] sm:$0xff] %vm1363, %v1327
        %1393 = vst.msk [vmem:[#allocation2 + $0xe8] sm:$0xff] %vm1363, %v1328
        %1394 = vst.msk [vmem:[#allocation2 + $0xf0] sm:$0xff] %vm1363, %v1329
        %1395 = vst.msk [vmem:[#allocation2 + $0xf8] sm:$0xff] %vm1363, %v1330
        %1396 = vst.msk [vmem:[#allocation2 + $0x100] sm:$0xff] %vm1363, %v1331
        %1397 = vst.msk [vmem:[#allocation2 + $0x108] sm:$0xff] %vm1363, %v1332
        %1398 = vst.msk [vmem:[#allocation2 + $0x110] sm:$0xff] %vm1363, %v1333
        %1399 = vst.msk [vmem:[#allocation2 + $0x118] sm:$0xff] %vm1363, %v1334
        %1400 = vst.msk [vmem:[#allocation2 + $0x120] sm:$0xff] %vm1363, %v1335
        %1401 = vst.msk [vmem:[#allocation2 + $0x128] sm:$0xff] %vm1363, %v1336
        %1402 = vst.msk [vmem:[#allocation2 + $0x130] sm:$0xff] %vm1363, %v1337
        %1403 = vst.msk [vmem:[#allocation2 + $0x138] sm:$0xff] %vm1363, %v1338
        %1404 = vst.msk [vmem:[#allocation2 + $0x140] sm:$0xff] %vm1363, %v1339
        %1405 = vst.msk [vmem:[#allocation2 + $0x148] sm:$0xff] %vm1363, %v1340
        %1406 = vst.msk [vmem:[#allocation2 + $0x150] sm:$0xff] %vm1363, %v1341
        %1407 = vst.msk [vmem:[#allocation2 + $0x158] sm:$0xff] %vm1363, %v1342
        %1408 = vst.msk [vmem:[#allocation2 + $0x160] sm:$0xff] %vm1363, %v1343
        %1409 = vst.msk [vmem:[#allocation2 + $0x168] sm:$0xff] %vm1363, %v1344
        %1410 = vst.msk [vmem:[#allocation2 + $0x170] sm:$0xff] %vm1363, %v1345
        %1411 = vst.msk [vmem:[#allocation2 + $0x178] sm:$0xff] %vm1363, %v1346
        %1412 = vst.msk [vmem:[#allocation2 + $0x180] sm:$0xff] %vm1363, %v1347
        %1413 = vst.msk [vmem:[#allocation2 + $0x188] sm:$0xff] %vm1363, %v1348
        %1414 = vst.msk [vmem:[#allocation2 + $0x190] sm:$0xff] %vm1363, %v1349
        %1415 = vst.msk [vmem:[#allocation2 + $0x198] sm:$0xff] %vm1363, %v1350
        %1416 = vst.msk [vmem:[#allocation2 + $0x1a0] sm:$0xff] %vm1363, %v1351
        %1417 = vst.msk [vmem:[#allocation2 + $0x1a8] sm:$0xff] %vm1363, %v1352
        %1418 = vst.msk [vmem:[#allocation2 + $0x1b0] sm:$0xff] %vm1363, %v1353
        %1419 = vst.msk [vmem:[#allocation2 + $0x1b8] sm:$0xff] %vm1363, %v1354
        %1420 = vst.msk [vmem:[#allocation2 + $0x1c0] sm:$0xff] %vm1363, %v1355
        %1421 = vst.msk [vmem:[#allocation2 + $0x1c8] sm:$0xff] %vm1363, %v1356
        %1422 = vst.msk [vmem:[#allocation2 + $0x1d0] sm:$0xff] %vm1363, %v1357
        %1423 = vst.msk [vmem:[#allocation2 + $0x1d8] sm:$0xff] %vm1363, %v1358
        %1424 = vst.msk [vmem:[#allocation2 + $0x1e0] sm:$0xff] %vm1363, %v1359
        %1425 = vst.msk [vmem:[#allocation2 + $0x1e8] sm:$0xff] %vm1363, %v1360
        %1426 = vst.msk [vmem:[#allocation2 + $0x1f0] sm:$0xff] %vm1363, %v1361
        %1427 = vst.msk [vmem:[#allocation2 + $0x1f8] sm:$0xff] %vm1363, %v1362
        // Predicated region
        $region45: #{tpu_custom_call.1} parent=35 // pred_check
          %p1428 = pneg %p316
        $region46: #{tpu_custom_call.1} parent=35 // pred_check_branch
          %1430 = sbr.rel (%p1428) target = $region48
        $region47: #{tpu_custom_call.1} parent=35 // pred_region
          %v1431 = vld [vmem:[#allocation2] sm:$0xff]
          %v1432 = vld [vmem:[#allocation2 + $0x8] sm:$0xff]
          %v1433 = vld [vmem:[#allocation2 + $0x10] sm:$0xff]
          %v1434 = vld [vmem:[#allocation2 + $0x18] sm:$0xff]
          %v1435 = vld [vmem:[#allocation2 + $0x20] sm:$0xff]
          %v1436 = vld [vmem:[#allocation2 + $0x28] sm:$0xff]
          %v1437 = vld [vmem:[#allocation2 + $0x30] sm:$0xff]
          %v1438 = vld [vmem:[#allocation2 + $0x38] sm:$0xff]
          %v1439 = vld [vmem:[#allocation2 + $0x40] sm:$0xff]
          %v1440 = vld [vmem:[#allocation2 + $0x48] sm:$0xff]
          %v1441 = vld [vmem:[#allocation2 + $0x50] sm:$0xff]
          %v1442 = vld [vmem:[#allocation2 + $0x58] sm:$0xff]
          %v1443 = vld [vmem:[#allocation2 + $0x60] sm:$0xff]
          %v1444 = vld [vmem:[#allocation2 + $0x68] sm:$0xff]
          %v1445 = vld [vmem:[#allocation2 + $0x70] sm:$0xff]
          %v1446 = vld [vmem:[#allocation2 + $0x78] sm:$0xff]
          %v1447 = vld [vmem:[#allocation2 + $0x80] sm:$0xff]
          %v1448 = vld [vmem:[#allocation2 + $0x88] sm:$0xff]
          %v1449 = vld [vmem:[#allocation2 + $0x90] sm:$0xff]
          %v1450 = vld [vmem:[#allocation2 + $0x98] sm:$0xff]
          %v1451 = vld [vmem:[#allocation2 + $0xa0] sm:$0xff]
          %v1452 = vld [vmem:[#allocation2 + $0xa8] sm:$0xff]
          %v1453 = vld [vmem:[#allocation2 + $0xb0] sm:$0xff]
          %v1454 = vld [vmem:[#allocation2 + $0xb8] sm:$0xff]
          %v1455 = vld [vmem:[#allocation2 + $0xc0] sm:$0xff]
          %v1456 = vld [vmem:[#allocation2 + $0xc8] sm:$0xff]
          %v1457 = vld [vmem:[#allocation2 + $0xd0] sm:$0xff]
          %v1458 = vld [vmem:[#allocation2 + $0xd8] sm:$0xff]
          %v1459 = vld [vmem:[#allocation2 + $0xe0] sm:$0xff]
          %v1460 = vld [vmem:[#allocation2 + $0xe8] sm:$0xff]
          %v1461 = vld [vmem:[#allocation2 + $0xf0] sm:$0xff]
          %v1462 = vld [vmem:[#allocation2 + $0xf8] sm:$0xff]
          %v1463 = vld [vmem:[#allocation2 + $0x100] sm:$0xff]
          %v1464 = vld [vmem:[#allocation2 + $0x108] sm:$0xff]
          %v1465 = vld [vmem:[#allocation2 + $0x110] sm:$0xff]
          %v1466 = vld [vmem:[#allocation2 + $0x118] sm:$0xff]
          %v1467 = vld [vmem:[#allocation2 + $0x120] sm:$0xff]
          %v1468 = vld [vmem:[#allocation2 + $0x128] sm:$0xff]
          %v1469 = vld [vmem:[#allocation2 + $0x130] sm:$0xff]
          %v1470 = vld [vmem:[#allocation2 + $0x138] sm:$0xff]
          %v1471 = vld [vmem:[#allocation2 + $0x140] sm:$0xff]
          %v1472 = vld [vmem:[#allocation2 + $0x148] sm:$0xff]
          %v1473 = vld [vmem:[#allocation2 + $0x150] sm:$0xff]
          %v1474 = vld [vmem:[#allocation2 + $0x158] sm:$0xff]
          %v1475 = vld [vmem:[#allocation2 + $0x160] sm:$0xff]
          %v1476 = vld [vmem:[#allocation2 + $0x168] sm:$0xff]
          %v1477 = vld [vmem:[#allocation2 + $0x170] sm:$0xff]
          %v1478 = vld [vmem:[#allocation2 + $0x178] sm:$0xff]
          %v1479 = vld [vmem:[#allocation2 + $0x180] sm:$0xff]
          %v1480 = vld [vmem:[#allocation2 + $0x188] sm:$0xff]
          %v1481 = vld [vmem:[#allocation2 + $0x190] sm:$0xff]
          %v1482 = vld [vmem:[#allocation2 + $0x198] sm:$0xff]
          %v1483 = vld [vmem:[#allocation2 + $0x1a0] sm:$0xff]
          %v1484 = vld [vmem:[#allocation2 + $0x1a8] sm:$0xff]
          %v1485 = vld [vmem:[#allocation2 + $0x1b0] sm:$0xff]
          %v1486 = vld [vmem:[#allocation2 + $0x1b8] sm:$0xff]
          %v1487 = vld [vmem:[#allocation2 + $0x1c0] sm:$0xff]
          %v1488 = vld [vmem:[#allocation2 + $0x1c8] sm:$0xff]
          %v1489 = vld [vmem:[#allocation2 + $0x1d0] sm:$0xff]
          %v1490 = vld [vmem:[#allocation2 + $0x1d8] sm:$0xff]
          %v1491 = vld [vmem:[#allocation2 + $0x1e0] sm:$0xff]
          %v1492 = vld [vmem:[#allocation2 + $0x1e8] sm:$0xff]
          %v1493 = vld [vmem:[#allocation2 + $0x1f0] sm:$0xff]
          %v1494 = vld [vmem:[#allocation2 + $0x1f8] sm:$0xff]
          %v1495 = vld [vmem:[%s303] sm:$0x1]
          %v1497 = vperm.slane %v1495, 0
          %v1499 = vmul.f32 %v1431, %v1497
          %v1500 = vmul.f32 %v1432, %v1497
          %v1501 = vmul.f32 %v1433, %v1497
          %v1502 = vmul.f32 %v1434, %v1497
          %v1503 = vmul.f32 %v1435, %v1497
          %v1504 = vmul.f32 %v1436, %v1497
          %v1505 = vmul.f32 %v1437, %v1497
          %v1506 = vmul.f32 %v1438, %v1497
          %v1507 = vmul.f32 %v1439, %v1497
          %v1508 = vmul.f32 %v1440, %v1497
          %v1509 = vmul.f32 %v1441, %v1497
          %v1510 = vmul.f32 %v1442, %v1497
          %v1511 = vmul.f32 %v1443, %v1497
          %v1512 = vmul.f32 %v1444, %v1497
          %v1513 = vmul.f32 %v1445, %v1497
          %v1514 = vmul.f32 %v1446, %v1497
          %v1515 = vmul.f32 %v1447, %v1497
          %v1516 = vmul.f32 %v1448, %v1497
          %v1517 = vmul.f32 %v1449, %v1497
          %v1518 = vmul.f32 %v1450, %v1497
          %v1519 = vmul.f32 %v1451, %v1497
          %v1520 = vmul.f32 %v1452, %v1497
          %v1521 = vmul.f32 %v1453, %v1497
          %v1522 = vmul.f32 %v1454, %v1497
          %v1523 = vmul.f32 %v1455, %v1497
          %v1524 = vmul.f32 %v1456, %v1497
          %v1525 = vmul.f32 %v1457, %v1497
          %v1526 = vmul.f32 %v1458, %v1497
          %v1527 = vmul.f32 %v1459, %v1497
          %v1528 = vmul.f32 %v1460, %v1497
          %v1529 = vmul.f32 %v1461, %v1497
          %v1530 = vmul.f32 %v1462, %v1497
          %v1531 = vmul.f32 %v1463, %v1497
          %v1532 = vmul.f32 %v1464, %v1497
          %v1533 = vmul.f32 %v1465, %v1497
          %v1534 = vmul.f32 %v1466, %v1497
          %v1535 = vmul.f32 %v1467, %v1497
          %v1536 = vmul.f32 %v1468, %v1497
          %v1537 = vmul.f32 %v1469, %v1497
          %v1538 = vmul.f32 %v1470, %v1497
          %v1539 = vmul.f32 %v1471, %v1497
          %v1540 = vmul.f32 %v1472, %v1497
          %v1541 = vmul.f32 %v1473, %v1497
          %v1542 = vmul.f32 %v1474, %v1497
          %v1543 = vmul.f32 %v1475, %v1497
          %v1544 = vmul.f32 %v1476, %v1497
          %v1545 = vmul.f32 %v1477, %v1497
          %v1546 = vmul.f32 %v1478, %v1497
          %v1547 = vmul.f32 %v1479, %v1497
          %v1548 = vmul.f32 %v1480, %v1497
          %v1549 = vmul.f32 %v1481, %v1497
          %v1550 = vmul.f32 %v1482, %v1497
          %v1551 = vmul.f32 %v1483, %v1497
          %v1552 = vmul.f32 %v1484, %v1497
          %v1553 = vmul.f32 %v1485, %v1497
          %v1554 = vmul.f32 %v1486, %v1497
          %v1555 = vmul.f32 %v1487, %v1497
          %v1556 = vmul.f32 %v1488, %v1497
          %v1557 = vmul.f32 %v1489, %v1497
          %v1558 = vmul.f32 %v1490, %v1497
          %v1559 = vmul.f32 %v1491, %v1497
          %v1560 = vmul.f32 %v1492, %v1497
          %v1561 = vmul.f32 %v1493, %v1497
          %v1562 = vmul.f32 %v1494, %v1497
          %v1563 = vld [vmem:[%s306] sm:$0x1]
          %v1565 = vperm.slane %v1563, 0
          %v1567 = vadd.f32 %v1499, %v1565
          %v1568 = vadd.f32 %v1500, %v1565
          %v1569 = vadd.f32 %v1501, %v1565
          %v1570 = vadd.f32 %v1502, %v1565
          %v1571 = vadd.f32 %v1503, %v1565
          %v1572 = vadd.f32 %v1504, %v1565
          %v1573 = vadd.f32 %v1505, %v1565
          %v1574 = vadd.f32 %v1506, %v1565
          %v1575 = vadd.f32 %v1507, %v1565
          %v1576 = vadd.f32 %v1508, %v1565
          %v1577 = vadd.f32 %v1509, %v1565
          %v1578 = vadd.f32 %v1510, %v1565
          %v1579 = vadd.f32 %v1511, %v1565
          %v1580 = vadd.f32 %v1512, %v1565
          %v1581 = vadd.f32 %v1513, %v1565
          %v1582 = vadd.f32 %v1514, %v1565
          %v1583 = vadd.f32 %v1515, %v1565
          %v1584 = vadd.f32 %v1516, %v1565
          %v1585 = vadd.f32 %v1517, %v1565
          %v1586 = vadd.f32 %v1518, %v1565
          %v1587 = vadd.f32 %v1519, %v1565
          %v1588 = vadd.f32 %v1520, %v1565
          %v1589 = vadd.f32 %v1521, %v1565
          %v1590 = vadd.f32 %v1522, %v1565
          %v1591 = vadd.f32 %v1523, %v1565
          %v1592 = vadd.f32 %v1524, %v1565
          %v1593 = vadd.f32 %v1525, %v1565
          %v1594 = vadd.f32 %v1526, %v1565
          %v1595 = vadd.f32 %v1527, %v1565
          %v1596 = vadd.f32 %v1528, %v1565
          %v1597 = vadd.f32 %v1529, %v1565
          %v1598 = vadd.f32 %v1530, %v1565
          %v1599 = vadd.f32 %v1531, %v1565
          %v1600 = vadd.f32 %v1532, %v1565
          %v1601 = vadd.f32 %v1533, %v1565
          %v1602 = vadd.f32 %v1534, %v1565
          %v1603 = vadd.f32 %v1535, %v1565
          %v1604 = vadd.f32 %v1536, %v1565
          %v1605 = vadd.f32 %v1537, %v1565
          %v1606 = vadd.f32 %v1538, %v1565
          %v1607 = vadd.f32 %v1539, %v1565
          %v1608 = vadd.f32 %v1540, %v1565
          %v1609 = vadd.f32 %v1541, %v1565
          %v1610 = vadd.f32 %v1542, %v1565
          %v1611 = vadd.f32 %v1543, %v1565
          %v1612 = vadd.f32 %v1544, %v1565
          %v1613 = vadd.f32 %v1545, %v1565
          %v1614 = vadd.f32 %v1546, %v1565
          %v1615 = vadd.f32 %v1547, %v1565
          %v1616 = vadd.f32 %v1548, %v1565
          %v1617 = vadd.f32 %v1549, %v1565
          %v1618 = vadd.f32 %v1550, %v1565
          %v1619 = vadd.f32 %v1551, %v1565
          %v1620 = vadd.f32 %v1552, %v1565
          %v1621 = vadd.f32 %v1553, %v1565
          %v1622 = vadd.f32 %v1554, %v1565
          %v1623 = vadd.f32 %v1555, %v1565
          %v1624 = vadd.f32 %v1556, %v1565
          %v1625 = vadd.f32 %v1557, %v1565
          %v1626 = vadd.f32 %v1558, %v1565
          %v1627 = vadd.f32 %v1559, %v1565
          %v1628 = vadd.f32 %v1560, %v1565
          %v1629 = vadd.f32 %v1561, %v1565
          %v1630 = vadd.f32 %v1562, %v1565
          %v1631 = vmax.f32 %v1567, 0.0
          %v1632 = vmax.f32 %v1568, 0.0
          %v1633 = vmax.f32 %v1569, 0.0
          %v1634 = vmax.f32 %v1570, 0.0
          %v1635 = vmax.f32 %v1571, 0.0
          %v1636 = vmax.f32 %v1572, 0.0
          %v1637 = vmax.f32 %v1573, 0.0
          %v1638 = vmax.f32 %v1574, 0.0
          %v1639 = vmax.f32 %v1575, 0.0
          %v1640 = vmax.f32 %v1576, 0.0
          %v1641 = vmax.f32 %v1577, 0.0
          %v1642 = vmax.f32 %v1578, 0.0
          %v1643 = vmax.f32 %v1579, 0.0
          %v1644 = vmax.f32 %v1580, 0.0
          %v1645 = vmax.f32 %v1581, 0.0
          %v1646 = vmax.f32 %v1582, 0.0
          %v1647 = vmax.f32 %v1583, 0.0
          %v1648 = vmax.f32 %v1584, 0.0
          %v1649 = vmax.f32 %v1585, 0.0
          %v1650 = vmax.f32 %v1586, 0.0
          %v1651 = vmax.f32 %v1587, 0.0
          %v1652 = vmax.f32 %v1588, 0.0
          %v1653 = vmax.f32 %v1589, 0.0
          %v1654 = vmax.f32 %v1590, 0.0
          %v1655 = vmax.f32 %v1591, 0.0
          %v1656 = vmax.f32 %v1592, 0.0
          %v1657 = vmax.f32 %v1593, 0.0
          %v1658 = vmax.f32 %v1594, 0.0
          %v1659 = vmax.f32 %v1595, 0.0
          %v1660 = vmax.f32 %v1596, 0.0
          %v1661 = vmax.f32 %v1597, 0.0
          %v1662 = vmax.f32 %v1598, 0.0
          %v1663 = vmax.f32 %v1599, 0.0
          %v1664 = vmax.f32 %v1600, 0.0
          %v1665 = vmax.f32 %v1601, 0.0
          %v1666 = vmax.f32 %v1602, 0.0
          %v1667 = vmax.f32 %v1603, 0.0
          %v1668 = vmax.f32 %v1604, 0.0
          %v1669 = vmax.f32 %v1605, 0.0
          %v1670 = vmax.f32 %v1606, 0.0
          %v1671 = vmax.f32 %v1607, 0.0
          %v1672 = vmax.f32 %v1608, 0.0
          %v1673 = vmax.f32 %v1609, 0.0
          %v1674 = vmax.f32 %v1610, 0.0
          %v1675 = vmax.f32 %v1611, 0.0
          %v1676 = vmax.f32 %v1612, 0.0
          %v1677 = vmax.f32 %v1613, 0.0
          %v1678 = vmax.f32 %v1614, 0.0
          %v1679 = vmax.f32 %v1615, 0.0
          %v1680 = vmax.f32 %v1616, 0.0
          %v1681 = vmax.f32 %v1617, 0.0
          %v1682 = vmax.f32 %v1618, 0.0
          %v1683 = vmax.f32 %v1619, 0.0
          %v1684 = vmax.f32 %v1620, 0.0
          %v1685 = vmax.f32 %v1621, 0.0
          %v1686 = vmax.f32 %v1622, 0.0
          %v1687 = vmax.f32 %v1623, 0.0
          %v1688 = vmax.f32 %v1624, 0.0
          %v1689 = vmax.f32 %v1625, 0.0
          %v1690 = vmax.f32 %v1626, 0.0
          %v1691 = vmax.f32 %v1627, 0.0
          %v1692 = vmax.f32 %v1628, 0.0
          %v1693 = vmax.f32 %v1629, 0.0
          %v1694 = vmax.f32 %v1630, 0.0
          %v1695 = vpack.c.bf16 %v1631, %v1631
          %v1696 = vpack.c.bf16 %v1632, %v1632
          %v1697 = vpack.c.bf16 %v1633, %v1633
          %v1698 = vpack.c.bf16 %v1634, %v1634
          %v1699 = vpack.c.bf16 %v1635, %v1635
          %v1700 = vpack.c.bf16 %v1636, %v1636
          %v1701 = vpack.c.bf16 %v1637, %v1637
          %v1702 = vpack.c.bf16 %v1638, %v1638
          %v1703 = vpack.c.bf16 %v1639, %v1639
          %v1704 = vpack.c.bf16 %v1640, %v1640
          %v1705 = vpack.c.bf16 %v1641, %v1641
          %v1706 = vpack.c.bf16 %v1642, %v1642
          %v1707 = vpack.c.bf16 %v1643, %v1643
          %v1708 = vpack.c.bf16 %v1644, %v1644
          %v1709 = vpack.c.bf16 %v1645, %v1645
          %v1710 = vpack.c.bf16 %v1646, %v1646
          %v1711 = vpack.c.bf16 %v1647, %v1647
          %v1712 = vpack.c.bf16 %v1648, %v1648
          %v1713 = vpack.c.bf16 %v1649, %v1649
          %v1714 = vpack.c.bf16 %v1650, %v1650
          %v1715 = vpack.c.bf16 %v1651, %v1651
          %v1716 = vpack.c.bf16 %v1652, %v1652
          %v1717 = vpack.c.bf16 %v1653, %v1653
          %v1718 = vpack.c.bf16 %v1654, %v1654
          %v1719 = vpack.c.bf16 %v1655, %v1655
          %v1720 = vpack.c.bf16 %v1656, %v1656
          %v1721 = vpack.c.bf16 %v1657, %v1657
          %v1722 = vpack.c.bf16 %v1658, %v1658
          %v1723 = vpack.c.bf16 %v1659, %v1659
          %v1724 = vpack.c.bf16 %v1660, %v1660
          %v1725 = vpack.c.bf16 %v1661, %v1661
          %v1726 = vpack.c.bf16 %v1662, %v1662
          %v1727 = vpack.c.bf16 %v1663, %v1663
          %v1728 = vpack.c.bf16 %v1664, %v1664
          %v1729 = vpack.c.bf16 %v1665, %v1665
          %v1730 = vpack.c.bf16 %v1666, %v1666
          %v1731 = vpack.c.bf16 %v1667, %v1667
          %v1732 = vpack.c.bf16 %v1668, %v1668
          %v1733 = vpack.c.bf16 %v1669, %v1669
          %v1734 = vpack.c.bf16 %v1670, %v1670
          %v1735 = vpack.c.bf16 %v1671, %v1671
          %v1736 = vpack.c.bf16 %v1672, %v1672
          %v1737 = vpack.c.bf16 %v1673, %v1673
          %v1738 = vpack.c.bf16 %v1674, %v1674
          %v1739 = vpack.c.bf16 %v1675, %v1675
          %v1740 = vpack.c.bf16 %v1676, %v1676
          %v1741 = vpack.c.bf16 %v1677, %v1677
          %v1742 = vpack.c.bf16 %v1678, %v1678
          %v1743 = vpack.c.bf16 %v1679, %v1679
          %v1744 = vpack.c.bf16 %v1680, %v1680
          %v1745 = vpack.c.bf16 %v1681, %v1681
          %v1746 = vpack.c.bf16 %v1682, %v1682
          %v1747 = vpack.c.bf16 %v1683, %v1683
          %v1748 = vpack.c.bf16 %v1684, %v1684
          %v1749 = vpack.c.bf16 %v1685, %v1685
          %v1750 = vpack.c.bf16 %v1686, %v1686
          %v1751 = vpack.c.bf16 %v1687, %v1687
          %v1752 = vpack.c.bf16 %v1688, %v1688
          %v1753 = vpack.c.bf16 %v1689, %v1689
          %v1754 = vpack.c.bf16 %v1690, %v1690
          %v1755 = vpack.c.bf16 %v1691, %v1691
          %v1756 = vpack.c.bf16 %v1692, %v1692
          %v1757 = vpack.c.bf16 %v1693, %v1693
          %v1758 = vpack.c.bf16 %v1694, %v1694
          %vm1759 = vcmask 519168
          %1760 = vst.msk [vmem:[%s314] sm:$0xf] %vm1759, %v1695
          %1761 = vst.msk [vmem:[%s314 + $0x4] sm:$0xf] %vm1759, %v1696
          %1762 = vst.msk [vmem:[%s314 + $0x8] sm:$0xf] %vm1759, %v1697
          %1763 = vst.msk [vmem:[%s314 + $0xc] sm:$0xf] %vm1759, %v1698
          %1764 = vst.msk [vmem:[%s314 + $0x10] sm:$0xf] %vm1759, %v1699
          %1765 = vst.msk [vmem:[%s314 + $0x14] sm:$0xf] %vm1759, %v1700
          %1766 = vst.msk [vmem:[%s314 + $0x18] sm:$0xf] %vm1759, %v1701
          %1767 = vst.msk [vmem:[%s314 + $0x1c] sm:$0xf] %vm1759, %v1702
          %1768 = vst.msk [vmem:[%s314 + $0x20] sm:$0xf] %vm1759, %v1703
          %1769 = vst.msk [vmem:[%s314 + $0x24] sm:$0xf] %vm1759, %v1704
          %1770 = vst.msk [vmem:[%s314 + $0x28] sm:$0xf] %vm1759, %v1705
          %1771 = vst.msk [vmem:[%s314 + $0x2c] sm:$0xf] %vm1759, %v1706
          %1772 = vst.msk [vmem:[%s314 + $0x30] sm:$0xf] %vm1759, %v1707
          %1773 = vst.msk [vmem:[%s314 + $0x34] sm:$0xf] %vm1759, %v1708
          %1774 = vst.msk [vmem:[%s314 + $0x38] sm:$0xf] %vm1759, %v1709
          %1775 = vst.msk [vmem:[%s314 + $0x3c] sm:$0xf] %vm1759, %v1710
          %1776 = vst.msk [vmem:[%s314 + $0x40] sm:$0xf] %vm1759, %v1711
          %1777 = vst.msk [vmem:[%s314 + $0x44] sm:$0xf] %vm1759, %v1712
          %1778 = vst.msk [vmem:[%s314 + $0x48] sm:$0xf] %vm1759, %v1713
          %1779 = vst.msk [vmem:[%s314 + $0x4c] sm:$0xf] %vm1759, %v1714
          %1780 = vst.msk [vmem:[%s314 + $0x50] sm:$0xf] %vm1759, %v1715
          %1781 = vst.msk [vmem:[%s314 + $0x54] sm:$0xf] %vm1759, %v1716
          %1782 = vst.msk [vmem:[%s314 + $0x58] sm:$0xf] %vm1759, %v1717
          %1783 = vst.msk [vmem:[%s314 + $0x5c] sm:$0xf] %vm1759, %v1718
          %1784 = vst.msk [vmem:[%s314 + $0x60] sm:$0xf] %vm1759, %v1719
          %1785 = vst.msk [vmem:[%s314 + $0x64] sm:$0xf] %vm1759, %v1720
          %1786 = vst.msk [vmem:[%s314 + $0x68] sm:$0xf] %vm1759, %v1721
          %1787 = vst.msk [vmem:[%s314 + $0x6c] sm:$0xf] %vm1759, %v1722
          %1788 = vst.msk [vmem:[%s314 + $0x70] sm:$0xf] %vm1759, %v1723
          %1789 = vst.msk [vmem:[%s314 + $0x74] sm:$0xf] %vm1759, %v1724
          %1790 = vst.msk [vmem:[%s314 + $0x78] sm:$0xf] %vm1759, %v1725
          %1791 = vst.msk [vmem:[%s314 + $0x7c] sm:$0xf] %vm1759, %v1726
          %1792 = vst.msk [vmem:[%s314 + $0x80] sm:$0xf] %vm1759, %v1727
          %1793 = vst.msk [vmem:[%s314 + $0x84] sm:$0xf] %vm1759, %v1728
          %1794 = vst.msk [vmem:[%s314 + $0x88] sm:$0xf] %vm1759, %v1729
          %1795 = vst.msk [vmem:[%s314 + $0x8c] sm:$0xf] %vm1759, %v1730
          %1796 = vst.msk [vmem:[%s314 + $0x90] sm:$0xf] %vm1759, %v1731
          %1797 = vst.msk [vmem:[%s314 + $0x94] sm:$0xf] %vm1759, %v1732
          %1798 = vst.msk [vmem:[%s314 + $0x98] sm:$0xf] %vm1759, %v1733
          %1799 = vst.msk [vmem:[%s314 + $0x9c] sm:$0xf] %vm1759, %v1734
          %1800 = vst.msk [vmem:[%s314 + $0xa0] sm:$0xf] %vm1759, %v1735
          %1801 = vst.msk [vmem:[%s314 + $0xa4] sm:$0xf] %vm1759, %v1736
          %1802 = vst.msk [vmem:[%s314 + $0xa8] sm:$0xf] %vm1759, %v1737
          %1803 = vst.msk [vmem:[%s314 + $0xac] sm:$0xf] %vm1759, %v1738
          %1804 = vst.msk [vmem:[%s314 + $0xb0] sm:$0xf] %vm1759, %v1739
          %1805 = vst.msk [vmem:[%s314 + $0xb4] sm:$0xf] %vm1759, %v1740
          %1806 = vst.msk [vmem:[%s314 + $0xb8] sm:$0xf] %vm1759, %v1741
          %1807 = vst.msk [vmem:[%s314 + $0xbc] sm:$0xf] %vm1759, %v1742
          %1808 = vst.msk [vmem:[%s314 + $0xc0] sm:$0xf] %vm1759, %v1743
          %1809 = vst.msk [vmem:[%s314 + $0xc4] sm:$0xf] %vm1759, %v1744
          %1810 = vst.msk [vmem:[%s314 + $0xc8] sm:$0xf] %vm1759, %v1745
          %1811 = vst.msk [vmem:[%s314 + $0xcc] sm:$0xf] %vm1759, %v1746
          %1812 = vst.msk [vmem:[%s314 + $0xd0] sm:$0xf] %vm1759, %v1747
          %1813 = vst.msk [vmem:[%s314 + $0xd4] sm:$0xf] %vm1759, %v1748
          %1814 = vst.msk [vmem:[%s314 + $0xd8] sm:$0xf] %vm1759, %v1749
          %1815 = vst.msk [vmem:[%s314 + $0xdc] sm:$0xf] %vm1759, %v1750
          %1816 = vst.msk [vmem:[%s314 + $0xe0] sm:$0xf] %vm1759, %v1751
          %1817 = vst.msk [vmem:[%s314 + $0xe4] sm:$0xf] %vm1759, %v1752
          %1818 = vst.msk [vmem:[%s314 + $0xe8] sm:$0xf] %vm1759, %v1753
          %1819 = vst.msk [vmem:[%s314 + $0xec] sm:$0xf] %vm1759, %v1754
          %1820 = vst.msk [vmem:[%s314 + $0xf0] sm:$0xf] %vm1759, %v1755
          %1821 = vst.msk [vmem:[%s314 + $0xf4] sm:$0xf] %vm1759, %v1756
          %1822 = vst.msk [vmem:[%s314 + $0xf8] sm:$0xf] %vm1759, %v1757
          %1823 = vst.msk [vmem:[%s314 + $0xfc] sm:$0xf] %vm1759, %v1758
        $region48: #{tpu_custom_call.1} parent=35 // pred_fallthru
          _
        %s1824 = smul.u32 64, %s23
        %p1825 = scmp.lt.s32.totalorder %s1824, 255
        %s1826 = scalar_select %p1825, %s1824, 255
        %p1827 = scmp.lt.s32.totalorder %s24, 0
        %s1828 = scalar_select %p1827, %s24, 0
        %s1829 = sadd.s32 %s1828, %s1826
        %s1830 = smul.addr %s1829, 4
        %s1831 = scalar_lea.vmem %s4, %s1830
        // Predicated region
        $region49: #{tpu_custom_call.1} parent=35 // pred_check
          %p1832 = pneg %p165
        $region50: #{tpu_custom_call.1} parent=35 // pred_check_branch
          %1834 = sbr.rel (%p1832) target = $region52
        $region51: #{tpu_custom_call.1} parent=35 // pred_region
          %s1835 = smul.u32 64, %s23
        $region52: #{tpu_custom_call.1} parent=35 // pred_fallthru
          _
      $region36: #{tpu_custom_call.1} parent=5 // pred_fallthru
        _
      %p1836 = scmp.le.s32.totalorder 2, %s13
      // Predicated region
      $region53: #{tpu_custom_call.1} parent=5 // pred_check
        %p1837 = pneg %p1836
      $region54: #{tpu_custom_call.1} parent=5 // pred_check_branch
        %1839 = sbr.rel (%p1837) target = $region56
      $region55: #{tpu_custom_call.1} parent=5 // pred_region
        %s1840 = ssub.s32 %s13, 2
        // Predicated region
        $region57: #{tpu_custom_call.1} parent=55 // pred_check
          %p1841 = pneg %p171
        $region58: #{tpu_custom_call.1} parent=55 // pred_check_branch
          %1843 = sbr.rel (%p1841) target = $region60
        $region59: #{tpu_custom_call.1} parent=55 // pred_region
          %s1844 = smul.u32 64, %s26
          %p1845 = scmp.lt.s32.totalorder %s1844, 255
          %s1846 = scalar_select %p1845, %s1844, 255
          %p1847 = scmp.lt.s32.totalorder %s27, 0
          %s1848 = scalar_select %p1847, %s27, 0
          %s1849 = sadd.s32 %s1848, %s1846
          %s1850 = smul.addr %s1849, 4
          %s1851 = scalar_lea.vmem %s4, %s1850
        $region60: #{tpu_custom_call.1} parent=55 // pred_fallthru
          _
      $region56: #{tpu_custom_call.1} parent=5 // pred_fallthru
        _
    $region6: #{tpu_custom_call.1} parent=1 // loop_footer
      %s17 = sadd.s32 1, %s13
    $region7: #{tpu_custom_call.1} parent=1 // loop_footer_branch
      %12 = sbr.rel target = $region3
    $region8: #{tpu_custom_call.1} parent=1 // loop_exit
      _
    %1852 = vsyncpa [#allocation4], 1
    %s1853 = scalar_lea.sflag [#allocation4], 1
    %1854 = vsyncpa %s1853, 1

</llo_original>
